<compile_context>
chip_gen: v6e
topology: v6e:2x2x1
jax: 0.10.0
libtpu: 0.0.40
codegen_flags: <defaults>
</compile_context>

<pallas_src>
import jax
import jax.numpy as jnp
from jax.experimental import pallas as pl
from jax.experimental.pallas import tpu as pltpu


def _align8(r):
    return -(-r // 8) * 8


def pack_params(params, D, E, O):
    """Pack every weight the kernel needs into one (R, 4D) f32 slab (once per model).

    Returns (slab, offsets) with offsets[name] = (row_start, n_rows, n_cols).
    Multi-row matmul weights start on 8-aligned rows; the five 1-row vectors share
    one 8-row tile.  The attention MLP weights (w1/b1/w2/b2) are NOT packed: the
    attention block is mathematically inert for (B,1) encoded input (context ==
    expand(x) every step) and is eliminated in the kernel.
    """
    lanes = 4 * D
    assert lanes >= E and lanes >= O
    f32 = jnp.float32

    offsets = {}
    pieces = []
    r = 0

    def add(name, mat):
        nonlocal r
        mat = jnp.asarray(mat, f32)
        offsets[name] = (r, mat.shape[0], mat.shape[1])
        pieces.append((r, mat))
        r += mat.shape[0]

    # Multi-row matmul weights: 8-aligned row starts.
    for name, mat in [
        ("w_hh",    params["w_hh"]),          # (D, 4D)
        ("w_ih",    params["w_ih"]),          # (O, 4D)
        ("w_fc_c",  params["w_fc"][:E]),      # (E, O)
        ("w_fc_y",  params["w_fc"][E:]),      # (O, O)
        ("w_out_h", params["w_out"][:D]),     # (D, O)
        ("w_out_c", params["w_out"][D:]),     # (E, O)
    ]:
        add(name, mat)
        r = _align8(r)
    # 1-row vectors: packed into consecutive rows of one 8-row tile.
    for name, mat in [
        ("b_g",   params["b_ih"] + params["b_hh"]),   # (1, 4D)
        ("w_exp", params["w_exp"]),                   # (1, E)
        ("b_exp", params["b_exp"]),                   # (1, E)
        ("b_fc",  params["b_fc"]),                    # (1, O)
        ("b_out", params["b_out"]),                   # (1, O)
    ]:
        add(name, mat)
    r = _align8(r)

    slab = jnp.zeros((r, lanes), f32)
    for r0, mat in pieces:
        slab = slab.at[r0:r0 + mat.shape[0], :mat.shape[1]].set(mat)
    return slab, offsets


def make_attn_decoder_kernel(B, T, D, E, O, woff, aoff):
    """Build the Pallas kernel body (shapes and slab offsets are static)."""
    f32 = jnp.float32
    bf16 = jnp.bfloat16

    def kernel(act_ref, w_ref, out_ref):
        def wsl(name):
            r0, nr, nc = woff[name]
            return w_ref[r0:r0 + nr, 0:nc]        # static slice of the packed weight slab

        def asl(name):
            r0, nr, nc = aoff[name]
            return act_ref[r0:r0 + nr, 0:nc]      # static slice of the packed activation slab

        w_hh   = wsl("w_hh")      # (D, 4D)
        w_ih   = wsl("w_ih")      # (O, 4D)
        b_g    = wsl("b_g")       # (1, 4D) == b_ih + b_hh
        w_fc_c = wsl("w_fc_c")    # (E, O)
        w_fc_y = wsl("w_fc_y")    # (O, O)
        b_fc   = wsl("b_fc")      # (1, O)
        w_o_h  = wsl("w_out_h")   # (D, O)
        w_o_c  = wsl("w_out_c")   # (E, O)
        b_out  = wsl("b_out")     # (1, O)
        w_exp  = wsl("w_exp")     # (1, E)
        b_exp  = wsl("b_exp")     # (1, E)

        h     = asl("h0")         # (B, D)
        c     = asl("c0")         # (B, D)
        x_enc = asl("x_enc")      # (B, 1)
        y_tb  = asl("y")          # (T*B, O), time-major: row t*B + b

        # expand: Linear(1, E) done as a VPU broadcast multiply (no MXU outer product).
        # Attention is a mathematical no-op here (all expanded rows identical, softmax
        # weights sum to 1), so context == expand(x) at every step.
        context = x_enc * w_exp + b_exp                                           # (B, E)

        # Loop-invariant precompute: fc([context, y_t]) split into its two halves and
        # pushed through w_ih up front, so the serial loop only contains h @ w_hh.
        ctx_fc = jnp.dot(context, w_fc_c, preferred_element_type=f32) + b_fc      # (B, O)
        g_ctx  = jnp.dot(ctx_fc, w_ih, preferred_element_type=f32) + b_g          # (B, 4D)
        y_fc   = jnp.dot(y_tb, w_fc_y, preferred_element_type=f32)                # (T*B, O)
        g_y    = jnp.dot(y_fc, w_ih, preferred_element_type=f32)                  # (T*B, 4D)

        # bf16 MXU operands for the only serially-dependent matmul; accumulate in f32.
        w_hh_bf = w_hh.astype(bf16)
        # TODO(synk): could hold w_hh in MXU staging registers across the loop via
        # pltpu.matmul_push_rhs / matmul_acc_lhs / matmul_pop; kept jnp.dot for portability.

        for t in range(T):                        # T is tiny & static -> unrolled
            gates = (g_ctx + g_y[t * B:(t + 1) * B, :]
                     + jnp.dot(h.astype(bf16), w_hh_bf, preferred_element_type=f32))
            sig = jax.nn.sigmoid(gates)           # one full-width sigmoid pass over 4D lanes
            tnh = jnp.tanh(gates)                 # one full-width tanh pass over 4D lanes
            i_g = sig[:, 0:D]
            f_g = sig[:, D:2 * D]
            g_g = tnh[:, 2 * D:3 * D]
            o_g = sig[:, 3 * D:4 * D]
            c = f_g * c + i_g * g_g
            h = o_g * jnp.tanh(c)

        # fc_out([h, context]) with the concat split into two narrow matmuls.
        out = (jnp.dot(h, w_o_h, preferred_element_type=f32)
               + jnp.dot(context, w_o_c, preferred_element_type=f32)
               + b_out)
        out_ref[...] = out.astype(out_ref.dtype)

    return kernel


def build_attn_decoder(params, *, B, T, D, E, O):
    """Pack weights once, build the pallas_call once, return a jitted decode fn."""
    lanes = 4 * D
    w_slab, woff = pack_params(params, D, E, O)          # once per model, NOT per call

    y_rows = _align8(T * B)
    aoff = {"h0": (0, B, D), "c0": (8, B, D), "x_enc": (16, B, 1), "y": (24, T * B, O)}
    act_rows = 24 + y_rows

    kernel = make_attn_decoder_kernel(B, T, D, E, O, woff, aoff)

    flops = 2 * (B * E                                    # expand broadcast-mul
                 + B * E * O + B * O * 4 * D              # ctx_fc, g_ctx
                 + T * B * O * O + T * B * O * 4 * D      # y_fc, g_y
                 + T * B * D * 4 * D                      # recurrence
                 + B * D * O + B * E * O)                 # fc_out
    cost = pl.CostEstimate(
        flops=flops,
        transcendentals=T * B * (4 * D + 4 * D + D),
        bytes_accessed=4 * (w_slab.size + act_rows * lanes + B * O),
    )

    call = pl.pallas_call(
        kernel,
        out_shape=jax.ShapeDtypeStruct((B, O), jnp.float32),
        in_specs=[pl.BlockSpec(memory_space=pltpu.MemorySpace.VMEM),
                  pl.BlockSpec(memory_space=pltpu.MemorySpace.VMEM)],
        out_specs=pl.BlockSpec(memory_space=pltpu.MemorySpace.VMEM),
        cost_estimate=cost,
    )
    # TODO(synk): when decoding many independent sequences, add a leading "parallel" grid
    # axis over them so v7x's second TensorCore is used.

    @jax.jit
    def run(x_enc, y_history, h0, c0, w_slab):
        # Pack the four tiny activations into one lane-padded slab (fused by XLA) so the
        # kernel sees 2 inputs / 3 DMAs total instead of 6.
        def block(x, rows):
            x = x.astype(jnp.float32)
            return jnp.pad(x, ((0, rows - x.shape[0]), (0, lanes - x.shape[1])))
        y_tb = jnp.transpose(y_history.astype(jnp.float32), (1, 0, 2)).reshape(T * B, O)
        act = jnp.concatenate(
            [block(h0, 8), block(c0, 8), block(x_enc, 8), block(y_tb, y_rows)], axis=0)
        return call(act, w_slab)

    def decode(input_encoded, y_history, h0, c0):
        # Attention elimination is only valid for a single (B, 1) encoded input row.
        assert input_encoded.shape == (B, 1), input_encoded.shape
        assert y_history.shape == (B, T, O), y_history.shape
        return run(input_encoded, y_history, h0, c0, w_slab)

    return decode


def attn_decoder_ref(x_enc, y_history, h0, c0, p):
    """Pure-JAX reference: full attention math, same as the PyTorch forward."""
    B, T, O = y_history.shape
    D = h0.shape[1]
    E = p["w_exp"].shape[1]
    exp_row = x_enc @ p["w_exp"] + p["b_exp"]
    expanded = jnp.broadcast_to(exp_row[:, None, :], (B, T, E))
    h, c = h0, c0
    context = jnp.zeros((B, E), jnp.float32)
    w1_h, w1_c, w1_e = p["w1"][:D], p["w1"][D:2 * D], p["w1"][2 * D:]
    for t in range(T):
        hc_part = h @ w1_h + c @ w1_c
        e_part = (expanded.reshape(B * T, E) @ w1_e).reshape(B, T, E)
        hidden = jnp.tanh(hc_part[:, None, :] + e_part + p["b1"][None])
        logits = ((hidden.reshape(B * T, E) @ p["w2"]) + p["b2"]).reshape(B, T)
        attn_w = jax.nn.softmax(logits, axis=1)
        context = jnp.sum(attn_w[:, :, None] * expanded, axis=1)
        y_tilde = jnp.concatenate([context, y_history[:, t]], axis=1) @ p["w_fc"] + p["b_fc"]
        gates = y_tilde @ p["w_ih"] + p["b_ih"] + h @ p["w_hh"] + p["b_hh"]
        i_g = jax.nn.sigmoid(gates[:, :D])
        f_g = jax.nn.sigmoid(gates[:, D:2 * D])
        g_g = jnp.tanh(gates[:, 2 * D:3 * D])
        o_g = jax.nn.sigmoid(gates[:, 3 * D:])
        c = f_g * c + i_g * g_g
        h = o_g * jnp.tanh(c)
    return jnp.concatenate([h, context], axis=1) @ p["w_out"] + p["b_out"]


if __name__ == "__main__":
    # config: seq_len=8, hidden_size_encoder=32, hidden_size_decoder=32, output_size=4
    B, T, E, D, O = 2, 8, 32, 32, 4

    key = jax.random.PRNGKey(0)
    ks = jax.random.split(key, 20)
    nrm = lambda k, shape, s=0.1: (s * jax.random.normal(k, shape)).astype(jnp.float32)

    # inputs
    x_enc = nrm(ks[0], (B, 1), 1.0)           # input_encoded
    y_history = nrm(ks[1], (B, T, O), 1.0)    # shifted targets
    # TODO(synk): PyTorch forward re-draws h0/c0 via xavier_normal_ each call (RNG side
    # effect); here they are deterministic inputs.
    h0 = nrm(ks[2], (B, D), 0.1)
    c0 = nrm(ks[3], (B, D), 0.1)

    # parameters (deterministic synthetic init; Linear weights stored as (in, out)).
    # w1/b1/w2/b2 (attention MLP) are only used by the reference: the attention output is
    # mathematically independent of them because all expanded rows are identical.
    params = {
        "w_exp": nrm(ks[4], (1, E)),           "b_exp": nrm(ks[5], (1, E)),
        "w1":    nrm(ks[6], (2 * D + E, E)),   "b1":    nrm(ks[7], (1, E)),
        "w2":    nrm(ks[8], (E, 1)),           "b2":    nrm(ks[9], (1, 1)),
        "w_ih":  nrm(ks[10], (O, 4 * D)),      "b_ih":  nrm(ks[11], (1, 4 * D)),
        "w_hh":  nrm(ks[12], (D, 4 * D)),      "b_hh":  nrm(ks[13], (1, 4 * D)),
        "w_fc":  nrm(ks[14], (E + O, O), 1.0), "b_fc":  nrm(ks[15], (1, O)),   # fc.weight ~ normal_()
        "w_out": nrm(ks[16], (D + E, O)),      "b_out": nrm(ks[17], (1, O)),
    }

    decode = build_attn_decoder(params, B=B, T=T, D=D, E=E, O=O)   # pack & compile once per model
    out = jax.block_until_ready(decode(x_enc, y_history, h0, c0))

    ref = attn_decoder_ref(x_enc, y_history, h0, c0, params)
    assert out.shape == (B, O)
    assert jnp.allclose(out, ref, rtol=1e-3, atol=1e-3), (out, ref)
    print("KERNEL_OK")
</pallas_src>

<mosaic_0001>
module attributes {stable_mosaic.version = 11 : i64} {
  func.func @kernel(%arg0: memref<40x128xf32, #tpu.memory_space<vmem>>, %arg1: memref<152x128xf32, #tpu.memory_space<vmem>>, %arg2: memref<2x4xf32, #tpu.memory_space<vmem>>) attributes {dimension_semantics = [], scalar_prefetch = 0 : i64, scratch_operands = 0 : i64, tpu.core_type = #tpu.core_type<tc>} {
    %c0 = arith.constant 0 : index
    %c0_0 = arith.constant 0 : index
    %0 = vector.load %arg1[%c0, %c0_0] : memref<152x128xf32, #tpu.memory_space<vmem>>, vector<32x128xf32>
    %c32 = arith.constant 32 : index
    %c0_1 = arith.constant 0 : index
    %1 = vector.load %arg1[%c32, %c0_1] : memref<152x128xf32, #tpu.memory_space<vmem>>, vector<4x128xf32>
    %c144 = arith.constant 144 : index
    %c0_2 = arith.constant 0 : index
    %2 = vector.load %arg1[%c144, %c0_2] : memref<152x128xf32, #tpu.memory_space<vmem>>, vector<1x128xf32>
    %c40 = arith.constant 40 : index
    %c0_3 = arith.constant 0 : index
    %3 = vector.load %arg1[%c40, %c0_3] : memref<152x128xf32, #tpu.memory_space<vmem>>, vector<32x4xf32>
    %c72 = arith.constant 72 : index
    %c0_4 = arith.constant 0 : index
    %4 = vector.load %arg1[%c72, %c0_4] : memref<152x128xf32, #tpu.memory_space<vmem>>, vector<4x4xf32>
    %c147 = arith.constant 147 : index
    %c0_5 = arith.constant 0 : index
    %5 = vector.load %arg1[%c147, %c0_5] : memref<152x128xf32, #tpu.memory_space<vmem>>, vector<1x4xf32>
    %c80 = arith.constant 80 : index
    %c0_6 = arith.constant 0 : index
    %6 = vector.load %arg1[%c80, %c0_6] : memref<152x128xf32, #tpu.memory_space<vmem>>, vector<32x4xf32>
    %c112 = arith.constant 112 : index
    %c0_7 = arith.constant 0 : index
    %7 = vector.load %arg1[%c112, %c0_7] : memref<152x128xf32, #tpu.memory_space<vmem>>, vector<32x4xf32>
    %c148 = arith.constant 148 : index
    %c0_8 = arith.constant 0 : index
    %8 = vector.load %arg1[%c148, %c0_8] : memref<152x128xf32, #tpu.memory_space<vmem>>, vector<1x4xf32>
    %c145 = arith.constant 145 : index
    %c0_9 = arith.constant 0 : index
    %9 = vector.load %arg1[%c145, %c0_9] : memref<152x128xf32, #tpu.memory_space<vmem>>, vector<1x32xf32>
    %c146 = arith.constant 146 : index
    %c0_10 = arith.constant 0 : index
    %10 = vector.load %arg1[%c146, %c0_10] : memref<152x128xf32, #tpu.memory_space<vmem>>, vector<1x32xf32>
    %c0_11 = arith.constant 0 : index
    %c0_12 = arith.constant 0 : index
    %11 = vector.load %arg0[%c0_11, %c0_12] : memref<40x128xf32, #tpu.memory_space<vmem>>, vector<2x32xf32>
    %c8 = arith.constant 8 : index
    %c0_13 = arith.constant 0 : index
    %12 = vector.load %arg0[%c8, %c0_13] : memref<40x128xf32, #tpu.memory_space<vmem>>, vector<2x32xf32>
    %c16 = arith.constant 16 : index
    %c0_14 = arith.constant 0 : index
    %13 = vector.load %arg0[%c16, %c0_14] : memref<40x128xf32, #tpu.memory_space<vmem>>, vector<2x1xf32>
    %c24 = arith.constant 24 : index
    %c0_15 = arith.constant 0 : index
    %14 = vector.load %arg0[%c24, %c0_15] : memref<40x128xf32, #tpu.memory_space<vmem>>, vector<16x4xf32>
    %15 = vector.broadcast %13 : vector<2x1xf32> to vector<2x32xf32>
    %16 = vector.broadcast %9 : vector<1x32xf32> to vector<2x32xf32>
    %17 = arith.mulf %15, %16 : vector<2x32xf32>
    %18 = vector.broadcast %10 : vector<1x32xf32> to vector<2x32xf32>
    %19 = arith.addf %17, %18 : vector<2x32xf32>
    %cst = arith.constant dense<0.000000e+00> : vector<2x4xf32>
    %20 = tpu.matmul %19, %3, %cst {dimension_numbers = #tpu.dot_dimension_numbers<[1], [0], [0], [1], [0, 0, 1, 1], [], []>} : vector<2x32xf32>, vector<32x4xf32>, vector<2x4xf32> -> vector<2x4xf32>
    %21 = vector.broadcast %5 : vector<1x4xf32> to vector<2x4xf32>
    %22 = arith.addf %20, %21 : vector<2x4xf32>
    %cst_16 = arith.constant dense<0.000000e+00> : vector<2x128xf32>
    %23 = tpu.matmul %22, %1, %cst_16 {dimension_numbers = #tpu.dot_dimension_numbers<[1], [0], [0], [1], [0, 0, 1, 1], [], []>} : vector<2x4xf32>, vector<4x128xf32>, vector<2x128xf32> -> vector<2x128xf32>
    %24 = vector.broadcast %2 : vector<1x128xf32> to vector<2x128xf32>
    %25 = arith.addf %23, %24 : vector<2x128xf32>
    %cst_17 = arith.constant dense<0.000000e+00> : vector<16x4xf32>
    %26 = tpu.matmul %14, %4, %cst_17 {dimension_numbers = #tpu.dot_dimension_numbers<[1], [0], [0], [1], [0, 0, 1, 1], [], []>} : vector<16x4xf32>, vector<4x4xf32>, vector<16x4xf32> -> vector<16x4xf32>
    %cst_18 = arith.constant dense<0.000000e+00> : vector<16x128xf32>
    %27 = tpu.matmul %26, %1, %cst_18 {dimension_numbers = #tpu.dot_dimension_numbers<[1], [0], [0], [1], [0, 0, 1, 1], [], []>} : vector<16x4xf32>, vector<4x128xf32>, vector<16x128xf32> -> vector<16x128xf32>
    %28 = arith.truncf %0 : vector<32x128xf32> to vector<32x128xbf16>
    %29 = vector.extract_strided_slice %27 {offsets = [0, 0], sizes = [2, 128], strides = [1, 1]} : vector<16x128xf32> to vector<2x128xf32>
    %30 = arith.addf %25, %29 : vector<2x128xf32>
    %31 = arith.truncf %11 : vector<2x32xf32> to vector<2x32xbf16>
    %cst_19 = arith.constant dense<0.000000e+00> : vector<2x128xf32>
    %32 = tpu.matmul %31, %28, %cst_19 {dimension_numbers = #tpu.dot_dimension_numbers<[1], [0], [0], [1], [0, 0, 1, 1], [], []>} : vector<2x32xbf16>, vector<32x128xbf16>, vector<2x128xf32> -> vector<2x128xf32>
    %33 = arith.addf %30, %32 : vector<2x128xf32>
    %34 = arith.negf %33 : vector<2x128xf32>
    %35 = math.exp %34 : vector<2x128xf32>
    %cst_20 = arith.constant 1.000000e+00 : f32
    %36 = vector.broadcast %cst_20 : f32 to vector<2x128xf32>
    %37 = arith.addf %36, %35 : vector<2x128xf32>
    %38 = arith.divf %36, %37 : vector<2x128xf32>
    %39 = math.tanh %33 : vector<2x128xf32>
    %40 = vector.extract_strided_slice %38 {offsets = [0, 0], sizes = [2, 32], strides = [1, 1]} : vector<2x128xf32> to vector<2x32xf32>
    %41 = vector.extract_strided_slice %38 {offsets = [0, 32], sizes = [2, 32], strides = [1, 1]} : vector<2x128xf32> to vector<2x32xf32>
    %42 = vector.extract_strided_slice %39 {offsets = [0, 64], sizes = [2, 32], strides = [1, 1]} : vector<2x128xf32> to vector<2x32xf32>
    %43 = vector.extract_strided_slice %38 {offsets = [0, 96], sizes = [2, 32], strides = [1, 1]} : vector<2x128xf32> to vector<2x32xf32>
    %44 = arith.mulf %41, %12 : vector<2x32xf32>
    %45 = arith.mulf %40, %42 : vector<2x32xf32>
    %46 = arith.addf %44, %45 : vector<2x32xf32>
    %47 = math.tanh %46 : vector<2x32xf32>
    %48 = arith.mulf %43, %47 : vector<2x32xf32>
    %49 = vector.extract_strided_slice %27 {offsets = [2, 0], sizes = [2, 128], strides = [1, 1]} : vector<16x128xf32> to vector<2x128xf32>
    %50 = arith.addf %25, %49 : vector<2x128xf32>
    %51 = arith.truncf %48 : vector<2x32xf32> to vector<2x32xbf16>
    %cst_21 = arith.constant dense<0.000000e+00> : vector<2x128xf32>
    %52 = tpu.matmul %51, %28, %cst_21 {dimension_numbers = #tpu.dot_dimension_numbers<[1], [0], [0], [1], [0, 0, 1, 1], [], []>} : vector<2x32xbf16>, vector<32x128xbf16>, vector<2x128xf32> -> vector<2x128xf32>
    %53 = arith.addf %50, %52 : vector<2x128xf32>
    %54 = arith.negf %53 : vector<2x128xf32>
    %55 = math.exp %54 : vector<2x128xf32>
    %cst_22 = arith.constant 1.000000e+00 : f32
    %56 = vector.broadcast %cst_22 : f32 to vector<2x128xf32>
    %57 = arith.addf %56, %55 : vector<2x128xf32>
    %58 = arith.divf %56, %57 : vector<2x128xf32>
    %59 = math.tanh %53 : vector<2x128xf32>
    %60 = vector.extract_strided_slice %58 {offsets = [0, 0], sizes = [2, 32], strides = [1, 1]} : vector<2x128xf32> to vector<2x32xf32>
    %61 = vector.extract_strided_slice %58 {offsets = [0, 32], sizes = [2, 32], strides = [1, 1]} : vector<2x128xf32> to vector<2x32xf32>
    %62 = vector.extract_strided_slice %59 {offsets = [0, 64], sizes = [2, 32], strides = [1, 1]} : vector<2x128xf32> to vector<2x32xf32>
    %63 = vector.extract_strided_slice %58 {offsets = [0, 96], sizes = [2, 32], strides = [1, 1]} : vector<2x128xf32> to vector<2x32xf32>
    %64 = arith.mulf %61, %46 : vector<2x32xf32>
    %65 = arith.mulf %60, %62 : vector<2x32xf32>
    %66 = arith.addf %64, %65 : vector<2x32xf32>
    %67 = math.tanh %66 : vector<2x32xf32>
    %68 = arith.mulf %63, %67 : vector<2x32xf32>
    %69 = vector.extract_strided_slice %27 {offsets = [4, 0], sizes = [2, 128], strides = [1, 1]} : vector<16x128xf32> to vector<2x128xf32>
    %70 = arith.addf %25, %69 : vector<2x128xf32>
    %71 = arith.truncf %68 : vector<2x32xf32> to vector<2x32xbf16>
    %cst_23 = arith.constant dense<0.000000e+00> : vector<2x128xf32>
    %72 = tpu.matmul %71, %28, %cst_23 {dimension_numbers = #tpu.dot_dimension_numbers<[1], [0], [0], [1], [0, 0, 1, 1], [], []>} : vector<2x32xbf16>, vector<32x128xbf16>, vector<2x128xf32> -> vector<2x128xf32>
    %73 = arith.addf %70, %72 : vector<2x128xf32>
    %74 = arith.negf %73 : vector<2x128xf32>
    %75 = math.exp %74 : vector<2x128xf32>
    %cst_24 = arith.constant 1.000000e+00 : f32
    %76 = vector.broadcast %cst_24 : f32 to vector<2x128xf32>
    %77 = arith.addf %76, %75 : vector<2x128xf32>
    %78 = arith.divf %76, %77 : vector<2x128xf32>
    %79 = math.tanh %73 : vector<2x128xf32>
    %80 = vector.extract_strided_slice %78 {offsets = [0, 0], sizes = [2, 32], strides = [1, 1]} : vector<2x128xf32> to vector<2x32xf32>
    %81 = vector.extract_strided_slice %78 {offsets = [0, 32], sizes = [2, 32], strides = [1, 1]} : vector<2x128xf32> to vector<2x32xf32>
    %82 = vector.extract_strided_slice %79 {offsets = [0, 64], sizes = [2, 32], strides = [1, 1]} : vector<2x128xf32> to vector<2x32xf32>
    %83 = vector.extract_strided_slice %78 {offsets = [0, 96], sizes = [2, 32], strides = [1, 1]} : vector<2x128xf32> to vector<2x32xf32>
    %84 = arith.mulf %81, %66 : vector<2x32xf32>
    %85 = arith.mulf %80, %82 : vector<2x32xf32>
    %86 = arith.addf %84, %85 : vector<2x32xf32>
    %87 = math.tanh %86 : vector<2x32xf32>
    %88 = arith.mulf %83, %87 : vector<2x32xf32>
    %89 = vector.extract_strided_slice %27 {offsets = [6, 0], sizes = [2, 128], strides = [1, 1]} : vector<16x128xf32> to vector<2x128xf32>
    %90 = arith.addf %25, %89 : vector<2x128xf32>
    %91 = arith.truncf %88 : vector<2x32xf32> to vector<2x32xbf16>
    %cst_25 = arith.constant dense<0.000000e+00> : vector<2x128xf32>
    %92 = tpu.matmul %91, %28, %cst_25 {dimension_numbers = #tpu.dot_dimension_numbers<[1], [0], [0], [1], [0, 0, 1, 1], [], []>} : vector<2x32xbf16>, vector<32x128xbf16>, vector<2x128xf32> -> vector<2x128xf32>
    %93 = arith.addf %90, %92 : vector<2x128xf32>
    %94 = arith.negf %93 : vector<2x128xf32>
    %95 = math.exp %94 : vector<2x128xf32>
    %cst_26 = arith.constant 1.000000e+00 : f32
    %96 = vector.broadcast %cst_26 : f32 to vector<2x128xf32>
    %97 = arith.addf %96, %95 : vector<2x128xf32>
    %98 = arith.divf %96, %97 : vector<2x128xf32>
    %99 = math.tanh %93 : vector<2x128xf32>
    %100 = vector.extract_strided_slice %98 {offsets = [0, 0], sizes = [2, 32], strides = [1, 1]} : vector<2x128xf32> to vector<2x32xf32>
    %101 = vector.extract_strided_slice %98 {offsets = [0, 32], sizes = [2, 32], strides = [1, 1]} : vector<2x128xf32> to vector<2x32xf32>
    %102 = vector.extract_strided_slice %99 {offsets = [0, 64], sizes = [2, 32], strides = [1, 1]} : vector<2x128xf32> to vector<2x32xf32>
    %103 = vector.extract_strided_slice %98 {offsets = [0, 96], sizes = [2, 32], strides = [1, 1]} : vector<2x128xf32> to vector<2x32xf32>
    %104 = arith.mulf %101, %86 : vector<2x32xf32>
    %105 = arith.mulf %100, %102 : vector<2x32xf32>
    %106 = arith.addf %104, %105 : vector<2x32xf32>
    %107 = math.tanh %106 : vector<2x32xf32>
    %108 = arith.mulf %103, %107 : vector<2x32xf32>
    %109 = vector.extract_strided_slice %27 {offsets = [8, 0], sizes = [2, 128], strides = [1, 1]} : vector<16x128xf32> to vector<2x128xf32>
    %110 = arith.addf %25, %109 : vector<2x128xf32>
    %111 = arith.truncf %108 : vector<2x32xf32> to vector<2x32xbf16>
    %cst_27 = arith.constant dense<0.000000e+00> : vector<2x128xf32>
    %112 = tpu.matmul %111, %28, %cst_27 {dimension_numbers = #tpu.dot_dimension_numbers<[1], [0], [0], [1], [0, 0, 1, 1], [], []>} : vector<2x32xbf16>, vector<32x128xbf16>, vector<2x128xf32> -> vector<2x128xf32>
    %113 = arith.addf %110, %112 : vector<2x128xf32>
    %114 = arith.negf %113 : vector<2x128xf32>
    %115 = math.exp %114 : vector<2x128xf32>
    %cst_28 = arith.constant 1.000000e+00 : f32
    %116 = vector.broadcast %cst_28 : f32 to vector<2x128xf32>
    %117 = arith.addf %116, %115 : vector<2x128xf32>
    %118 = arith.divf %116, %117 : vector<2x128xf32>
    %119 = math.tanh %113 : vector<2x128xf32>
    %120 = vector.extract_strided_slice %118 {offsets = [0, 0], sizes = [2, 32], strides = [1, 1]} : vector<2x128xf32> to vector<2x32xf32>
    %121 = vector.extract_strided_slice %118 {offsets = [0, 32], sizes = [2, 32], strides = [1, 1]} : vector<2x128xf32> to vector<2x32xf32>
    %122 = vector.extract_strided_slice %119 {offsets = [0, 64], sizes = [2, 32], strides = [1, 1]} : vector<2x128xf32> to vector<2x32xf32>
    %123 = vector.extract_strided_slice %118 {offsets = [0, 96], sizes = [2, 32], strides = [1, 1]} : vector<2x128xf32> to vector<2x32xf32>
    %124 = arith.mulf %121, %106 : vector<2x32xf32>
    %125 = arith.mulf %120, %122 : vector<2x32xf32>
    %126 = arith.addf %124, %125 : vector<2x32xf32>
    %127 = math.tanh %126 : vector<2x32xf32>
    %128 = arith.mulf %123, %127 : vector<2x32xf32>
    %129 = vector.extract_strided_slice %27 {offsets = [10, 0], sizes = [2, 128], strides = [1, 1]} : vector<16x128xf32> to vector<2x128xf32>
    %130 = arith.addf %25, %129 : vector<2x128xf32>
    %131 = arith.truncf %128 : vector<2x32xf32> to vector<2x32xbf16>
    %cst_29 = arith.constant dense<0.000000e+00> : vector<2x128xf32>
    %132 = tpu.matmul %131, %28, %cst_29 {dimension_numbers = #tpu.dot_dimension_numbers<[1], [0], [0], [1], [0, 0, 1, 1], [], []>} : vector<2x32xbf16>, vector<32x128xbf16>, vector<2x128xf32> -> vector<2x128xf32>
    %133 = arith.addf %130, %132 : vector<2x128xf32>
    %134 = arith.negf %133 : vector<2x128xf32>
    %135 = math.exp %134 : vector<2x128xf32>
    %cst_30 = arith.constant 1.000000e+00 : f32
    %136 = vector.broadcast %cst_30 : f32 to vector<2x128xf32>
    %137 = arith.addf %136, %135 : vector<2x128xf32>
    %138 = arith.divf %136, %137 : vector<2x128xf32>
    %139 = math.tanh %133 : vector<2x128xf32>
    %140 = vector.extract_strided_slice %138 {offsets = [0, 0], sizes = [2, 32], strides = [1, 1]} : vector<2x128xf32> to vector<2x32xf32>
    %141 = vector.extract_strided_slice %138 {offsets = [0, 32], sizes = [2, 32], strides = [1, 1]} : vector<2x128xf32> to vector<2x32xf32>
    %142 = vector.extract_strided_slice %139 {offsets = [0, 64], sizes = [2, 32], strides = [1, 1]} : vector<2x128xf32> to vector<2x32xf32>
    %143 = vector.extract_strided_slice %138 {offsets = [0, 96], sizes = [2, 32], strides = [1, 1]} : vector<2x128xf32> to vector<2x32xf32>
    %144 = arith.mulf %141, %126 : vector<2x32xf32>
    %145 = arith.mulf %140, %142 : vector<2x32xf32>
    %146 = arith.addf %144, %145 : vector<2x32xf32>
    %147 = math.tanh %146 : vector<2x32xf32>
    %148 = arith.mulf %143, %147 : vector<2x32xf32>
    %149 = vector.extract_strided_slice %27 {offsets = [12, 0], sizes = [2, 128], strides = [1, 1]} : vector<16x128xf32> to vector<2x128xf32>
    %150 = arith.addf %25, %149 : vector<2x128xf32>
    %151 = arith.truncf %148 : vector<2x32xf32> to vector<2x32xbf16>
    %cst_31 = arith.constant dense<0.000000e+00> : vector<2x128xf32>
    %152 = tpu.matmul %151, %28, %cst_31 {dimension_numbers = #tpu.dot_dimension_numbers<[1], [0], [0], [1], [0, 0, 1, 1], [], []>} : vector<2x32xbf16>, vector<32x128xbf16>, vector<2x128xf32> -> vector<2x128xf32>
    %153 = arith.addf %150, %152 : vector<2x128xf32>
    %154 = arith.negf %153 : vector<2x128xf32>
    %155 = math.exp %154 : vector<2x128xf32>
    %cst_32 = arith.constant 1.000000e+00 : f32
    %156 = vector.broadcast %cst_32 : f32 to vector<2x128xf32>
    %157 = arith.addf %156, %155 : vector<2x128xf32>
    %158 = arith.divf %156, %157 : vector<2x128xf32>
    %159 = math.tanh %153 : vector<2x128xf32>
    %160 = vector.extract_strided_slice %158 {offsets = [0, 0], sizes = [2, 32], strides = [1, 1]} : vector<2x128xf32> to vector<2x32xf32>
    %161 = vector.extract_strided_slice %158 {offsets = [0, 32], sizes = [2, 32], strides = [1, 1]} : vector<2x128xf32> to vector<2x32xf32>
    %162 = vector.extract_strided_slice %159 {offsets = [0, 64], sizes = [2, 32], strides = [1, 1]} : vector<2x128xf32> to vector<2x32xf32>
    %163 = vector.extract_strided_slice %158 {offsets = [0, 96], sizes = [2, 32], strides = [1, 1]} : vector<2x128xf32> to vector<2x32xf32>
    %164 = arith.mulf %161, %146 : vector<2x32xf32>
    %165 = arith.mulf %160, %162 : vector<2x32xf32>
    %166 = arith.addf %164, %165 : vector<2x32xf32>
    %167 = math.tanh %166 : vector<2x32xf32>
    %168 = arith.mulf %163, %167 : vector<2x32xf32>
    %169 = vector.extract_strided_slice %27 {offsets = [14, 0], sizes = [2, 128], strides = [1, 1]} : vector<16x128xf32> to vector<2x128xf32>
    %170 = arith.addf %25, %169 : vector<2x128xf32>
    %171 = arith.truncf %168 : vector<2x32xf32> to vector<2x32xbf16>
    %cst_33 = arith.constant dense<0.000000e+00> : vector<2x128xf32>
    %172 = tpu.matmul %171, %28, %cst_33 {dimension_numbers = #tpu.dot_dimension_numbers<[1], [0], [0], [1], [0, 0, 1, 1], [], []>} : vector<2x32xbf16>, vector<32x128xbf16>, vector<2x128xf32> -> vector<2x128xf32>
    %173 = arith.addf %170, %172 : vector<2x128xf32>
    %174 = arith.negf %173 : vector<2x128xf32>
    %175 = math.exp %174 : vector<2x128xf32>
    %cst_34 = arith.constant 1.000000e+00 : f32
    %176 = vector.broadcast %cst_34 : f32 to vector<2x128xf32>
    %177 = arith.addf %176, %175 : vector<2x128xf32>
    %178 = arith.divf %176, %177 : vector<2x128xf32>
    %179 = math.tanh %173 : vector<2x128xf32>
    %180 = vector.extract_strided_slice %178 {offsets = [0, 0], sizes = [2, 32], strides = [1, 1]} : vector<2x128xf32> to vector<2x32xf32>
    %181 = vector.extract_strided_slice %178 {offsets = [0, 32], sizes = [2, 32], strides = [1, 1]} : vector<2x128xf32> to vector<2x32xf32>
    %182 = vector.extract_strided_slice %179 {offsets = [0, 64], sizes = [2, 32], strides = [1, 1]} : vector<2x128xf32> to vector<2x32xf32>
    %183 = vector.extract_strided_slice %178 {offsets = [0, 96], sizes = [2, 32], strides = [1, 1]} : vector<2x128xf32> to vector<2x32xf32>
    %184 = arith.mulf %181, %166 : vector<2x32xf32>
    %185 = arith.mulf %180, %182 : vector<2x32xf32>
    %186 = arith.addf %184, %185 : vector<2x32xf32>
    %187 = math.tanh %186 : vector<2x32xf32>
    %188 = arith.mulf %183, %187 : vector<2x32xf32>
    %cst_35 = arith.constant dense<0.000000e+00> : vector<2x4xf32>
    %189 = tpu.matmul %188, %6, %cst_35 {dimension_numbers = #tpu.dot_dimension_numbers<[1], [0], [0], [1], [0, 0, 1, 1], [], []>} : vector<2x32xf32>, vector<32x4xf32>, vector<2x4xf32> -> vector<2x4xf32>
    %cst_36 = arith.constant dense<0.000000e+00> : vector<2x4xf32>
    %190 = tpu.matmul %19, %7, %cst_36 {dimension_numbers = #tpu.dot_dimension_numbers<[1], [0], [0], [1], [0, 0, 1, 1], [], []>} : vector<2x32xf32>, vector<32x4xf32>, vector<2x4xf32> -> vector<2x4xf32>
    %191 = arith.addf %189, %190 : vector<2x4xf32>
    %192 = vector.broadcast %8 : vector<1x4xf32> to vector<2x4xf32>
    %193 = arith.addf %191, %192 : vector<2x4xf32>
    %c0_37 = arith.constant 0 : index
    %c0_38 = arith.constant 0 : index
    %194 = vector.load %arg2[%c0_37, %c0_38] : memref<2x4xf32, #tpu.memory_space<vmem>>, vector<2x4xf32>
    tpu.vector_store %arg2[%c0_37, %c0_38], %193 {strides = array<i32>} : memref<2x4xf32, #tpu.memory_space<vmem>>, vector<2x4xf32>,
    return
  }
}

</mosaic_0001>

<llo_original>
// kernel: run.1
$region0: #{run.1}
  #allocation0 [shape = 'u32[]', space=smem, size = 0x4, offset = 0x4, fixed_abs, tag = 'smem constant byte address 0x4 - core index']
  #allocation1 [shape = 'u32[144,128]{1,0:T(1,128)}', space=vmem, size = 0x12000, scoped, tag = 'internal scratch']
  %s0 = inlined_call_operand.vmem [shape: f32[40,128], index: 0, kind: input, shape index: {}]
  %s1 = inlined_call_operand.hbm [shape: f32[152,128], index: 1, kind: input, shape index: {}]
  %s2 = inlined_call_operand.hbm [shape: f32[2,4], index: 2, kind: output, shape index: {}]
  %s3 = sld [smem:[#allocation0]]
  $region22: #{run.1} parent=0
    _
  %s5 = ssub.s32 1, %s3
  %s6 = scalar_select 0, %s5, %s3
  $region1: #{run.1} parent=0
    #allocation2 [shape = 'u8[77824]{0}', space=vmem, size = 0x13000, scoped, tag = 'input window, operand 1, single buffered']
    #allocation3 [shape = 's32[1]{0}', space=sflag, size = 0x4, scoped, tag = 'scoped memory for run.1']
    #allocation4 [shape = 's32[1]{0}', space=sflag, size = 0x4, scoped, tag = 'scoped memory for run.1']
    #allocation5 [shape = 'u8[1024]{0}', space=vmem, size = 0x400, scoped, tag = 'output window, operand 0, single buffered']
    %7 = vsyncpa [#allocation3], 0
    %8 = vsyncpa [#allocation4], 0
    // Predicated region
    $region2: #{run.1} parent=1 // pred_check
      _
    $region3: #{run.1} parent=1 // pred_check_branch
      %10 = sbr.rel (0) target = $region5
    $region4: #{run.1} parent=1 // pred_region
      _
    $region5: #{run.1} parent=1 // pred_fallthru
      _
    // Predicated region
    $region6: #{run.1} parent=1 // pred_check
      _
    $region7: #{run.1} parent=1 // pred_check_branch
      %12 = sbr.rel (0) target = $region9
    $region8: #{run.1} parent=1 // pred_region
      %s14 = ssub.s32 2432, 2432
      %15 = vsyncadd [#allocation3], %s14
      %s16 = sshll.u32 [#allocation2], 4
      %s17 = int_to_ptr.vmem [resolvable:$true] %s16
      %22 = dma.hbm_to_vmem [thread:$0]  %s1, 2432, %s17, [#allocation3], 128, 128, 8
    $region9: #{run.1} parent=1 // pred_fallthru
      _
    // Predicated region
    $region10: #{run.1} parent=1 // pred_check
      _
    $region11: #{run.1} parent=1 // pred_check_branch
      %24 = sbr.rel (0) target = $region13
    $region12: #{run.1} parent=1 // pred_region
      %25 = dma.done [#allocation3], 2432
    $region13: #{run.1} parent=1 // pred_fallthru
      _
    %v27 = vld [vmem:[#allocation2] sm:$0xff]
    %v28 = vld [vmem:[#allocation2 + $0x8] sm:$0xff]
    %v29 = vld [vmem:[#allocation2 + $0x10] sm:$0xff]
    %v30 = vld [vmem:[#allocation2 + $0x18] sm:$0xff]
    %v31 = vld [vmem:[#allocation2 + $0x20] sm:$0xf]
    %v32 = vld [vmem:[#allocation2 + $0x90] sm:$0x1]
    %v33 = vld [vmem:[#allocation2 + $0x28] sm:$0xff]
    %v34 = vld [vmem:[#allocation2 + $0x30] sm:$0xff]
    %v35 = vld [vmem:[#allocation2 + $0x38] sm:$0xff]
    %v36 = vld [vmem:[#allocation2 + $0x40] sm:$0xff]
    %v37 = vld [vmem:[#allocation2 + $0x48] sm:$0xf]
    %v38 = vld [vmem:[#allocation2 + $0x93] sm:$0x1]
    %v39 = vld [vmem:[#allocation2 + $0x50] sm:$0xff]
    %v40 = vld [vmem:[#allocation2 + $0x58] sm:$0xff]
    %v41 = vld [vmem:[#allocation2 + $0x60] sm:$0xff]
    %v42 = vld [vmem:[#allocation2 + $0x68] sm:$0xff]
    %v43 = vld [vmem:[#allocation2 + $0x70] sm:$0xff]
    %v44 = vld [vmem:[#allocation2 + $0x78] sm:$0xff]
    %v45 = vld [vmem:[#allocation2 + $0x80] sm:$0xff]
    %v46 = vld [vmem:[#allocation2 + $0x88] sm:$0xff]
    %v47 = vld [vmem:[#allocation2 + $0x94] sm:$0x1]
    %v48 = vld [vmem:[#allocation2 + $0x91] sm:$0x1]
    %v49 = vld [vmem:[#allocation2 + $0x92] sm:$0x1]
    %v50 = vld [vmem:[%s0] sm:$0x3]
    %v51 = vld [vmem:[%s0 + $0x8] sm:$0x3]
    %v52 = vld [vmem:[%s0 + $0x10] sm:$0x3]
    %v53 = vld [vmem:[%s0 + $0x18] sm:$0xff]
    %v54 = vld [vmem:[%s0 + $0x20] sm:$0xff]
    %56 = vset.pattern.permute.xlu0 0
    %57 = vperm.xlu0 %56, %v52
    %v58 = vpop.permute.xlu0 %57
    %v60 = vlaneseq
    %v61 = vshrl.u32 %v60, 7
    %v62 = vsub.s32 0, %v61
    %v63 = vrot.slane %v48, %v62
    %v64 = vmul.f32 %v58, %v63
    %v65 = vlaneseq
    %v66 = vshrl.u32 %v65, 7
    %v67 = vsub.s32 0, %v66
    %v68 = vrot.slane %v49, %v67
    %v69 = vadd.f32 %v64, %v68
    %v70 = vlaneseq
    %v71 = vshrl.u32 %v70, 7
    %v72 = vsub.s32 0, %v71
    %v73 = vrot.slane %v38, %v72
    %vm74 = vcmask 261120
    %v76 = vsel %vm74, %v69, 0
    %78 = vmatprep.subr.mxu0 0.0
    %79 = vmatpush1.msra.mxu0 0.0
    %80 = vmatprep.subr.mxu0 0.0
    %81 = vmatpush1.msra.mxu0 0.0
    %82 = vmatprep.subr.mxu0 0.0
    %83 = vmatpush1.msra.mxu0 0.0
    %84 = vmatprep.subr.mxu0 0.0
    %85 = vmatpush1.msra.mxu0 0.0
    %86 = vmatprep.subr.mxu0 0.0
    %87 = vmatpush1.msra.mxu0 0.0
    %88 = vmatprep.subr.mxu0 0.0
    %89 = vmatpush1.msra.mxu0 0.0
    %90 = vmatprep.subr.mxu0 0.0
    %91 = vmatpush1.msra.mxu0 0.0
    %92 = vmatprep.subr.mxu0 0.0
    %93 = vmatpush1.msra.mxu0 0.0
    %94 = vmatprep.subr.mxu0 0.0
    %95 = vmatpush1.msra.mxu0 0.0
    %96 = vmatprep.subr.mxu0 0.0
    %97 = vmatpush1.msra.mxu0 0.0
    %98 = vmatprep.subr.mxu0 0.0
    %99 = vmatpush1.msra.mxu0 0.0
    %100 = vmatprep.subr.mxu0 0.0
    %101 = vmatpush1.msra.mxu0 0.0
    %102 = vmatprep.subr.mxu0 0.0
    %103 = vmatpush1.msra.mxu0 %v36
    %104 = vmatprep.subr.mxu0 0.0
    %105 = vmatpush1.msra.mxu0 %v35
    %106 = vmatprep.subr.mxu0 0.0
    %107 = vmatpush1.msra.mxu0 %v34
    %108 = vmatprep.subr.mxu0 0.0
    %109 = vmatpush1.msra.mxu0 %v33
    %110 = vmatprep.subr.mxu0 0.0
    %111 = vmatpush2.msra.mxu0 0.0
    %112 = vmatprep.subr.mxu0 0.0
    %113 = vmatpush2.msra.mxu0 0.0
    %114 = vmatprep.subr.mxu0 0.0
    %115 = vmatpush2.msra.mxu0 0.0
    %116 = vmatprep.subr.mxu0 0.0
    %117 = vmatpush2.msra.mxu0 0.0
    %118 = vmatprep.subr.mxu0 0.0
    %119 = vmatpush2.msra.mxu0 0.0
    %120 = vmatprep.subr.mxu0 0.0
    %121 = vmatpush2.msra.mxu0 0.0
    %122 = vmatprep.subr.mxu0 0.0
    %123 = vmatpush2.msra.mxu0 0.0
    %124 = vmatprep.subr.mxu0 0.0
    %125 = vmatpush2.msra.mxu0 0.0
    %126 = vmatprep.subr.mxu0 0.0
    %127 = vmatpush2.msra.mxu0 0.0
    %128 = vmatprep.subr.mxu0 0.0
    %129 = vmatpush2.msra.mxu0 0.0
    %130 = vmatprep.subr.mxu0 0.0
    %131 = vmatpush2.msra.mxu0 0.0
    %132 = vmatprep.subr.mxu0 0.0
    %133 = vmatpush2.msra.mxu0 0.0
    %134 = vmatprep.subr.mxu0 0.0
    %135 = vmatpush2.msra.mxu0 0.0
    %136 = vmatprep.subr.mxu0 0.0
    %137 = vmatpush2.msra.mxu0 0.0
    %138 = vmatprep.subr.mxu0 0.0
    %139 = vmatpush2.msra.mxu0 0.0
    %140 = vmatprep.subr.mxu0 0.0
    %141 = vmatpush2.msra.mxu0 0.0
    %142 = vmatprep.mubr.f32.mxu0 0.0
    %143 = vmatmul.mubr.f32.gmra.mxu0 %v76
    %v144 = vpop.f32.mrf.mxu0
    %v145 = vadd.f32 %v73, %v144
    %v146 = vpop.f32.mrf.mxu0
    %147 = vdwg.mxu0
    %v148 = vlaneseq
    %v149 = vshrl.u32 %v148, 7
    %v150 = vsub.s32 0, %v149
    %v151 = vrot.slane %v32, %v150
    %vm152 = vcmask 31744
    %v154 = vsel %vm152, %v145, 0
    %vm156 = vcmask 1043456
    %v158 = vsel %vm156, %v31, 0
    %160 = vmatprep.subr.mxu0 0.0
    %161 = vmatpush1.msra.mxu0 0.0
    %162 = vmatprep.subr.mxu0 0.0
    %163 = vmatpush1.msra.mxu0 0.0
    %164 = vmatprep.subr.mxu0 0.0
    %165 = vmatpush1.msra.mxu0 0.0
    %166 = vmatprep.subr.mxu0 0.0
    %167 = vmatpush1.msra.mxu0 0.0
    %168 = vmatprep.subr.mxu0 0.0
    %169 = vmatpush1.msra.mxu0 0.0
    %170 = vmatprep.subr.mxu0 0.0
    %171 = vmatpush1.msra.mxu0 0.0
    %172 = vmatprep.subr.mxu0 0.0
    %173 = vmatpush1.msra.mxu0 0.0
    %174 = vmatprep.subr.mxu0 0.0
    %175 = vmatpush1.msra.mxu0 0.0
    %176 = vmatprep.subr.mxu0 0.0
    %177 = vmatpush1.msra.mxu0 0.0
    %178 = vmatprep.subr.mxu0 0.0
    %179 = vmatpush1.msra.mxu0 0.0
    %180 = vmatprep.subr.mxu0 0.0
    %181 = vmatpush1.msra.mxu0 0.0
    %182 = vmatprep.subr.mxu0 0.0
    %183 = vmatpush1.msra.mxu0 0.0
    %184 = vmatprep.subr.mxu0 0.0
    %185 = vmatpush1.msra.mxu0 0.0
    %186 = vmatprep.subr.mxu0 0.0
    %187 = vmatpush1.msra.mxu0 0.0
    %188 = vmatprep.subr.mxu0 0.0
    %189 = vmatpush1.msra.mxu0 0.0
    %190 = vmatprep.subr.mxu0 0.0
    %191 = vmatpush1.msra.mxu0 %v158
    %192 = vmatprep.subr.mxu0 0.0
    %193 = vmatpush2.msra.mxu0 0.0
    %194 = vmatprep.subr.mxu0 0.0
    %195 = vmatpush2.msra.mxu0 0.0
    %196 = vmatprep.subr.mxu0 0.0
    %197 = vmatpush2.msra.mxu0 0.0
    %198 = vmatprep.subr.mxu0 0.0
    %199 = vmatpush2.msra.mxu0 0.0
    %200 = vmatprep.subr.mxu0 0.0
    %201 = vmatpush2.msra.mxu0 0.0
    %202 = vmatprep.subr.mxu0 0.0
    %203 = vmatpush2.msra.mxu0 0.0
    %204 = vmatprep.subr.mxu0 0.0
    %205 = vmatpush2.msra.mxu0 0.0
    %206 = vmatprep.subr.mxu0 0.0
    %207 = vmatpush2.msra.mxu0 0.0
    %208 = vmatprep.subr.mxu0 0.0
    %209 = vmatpush2.msra.mxu0 0.0
    %210 = vmatprep.subr.mxu0 0.0
    %211 = vmatpush2.msra.mxu0 0.0
    %212 = vmatprep.subr.mxu0 0.0
    %213 = vmatpush2.msra.mxu0 0.0
    %214 = vmatprep.subr.mxu0 0.0
    %215 = vmatpush2.msra.mxu0 0.0
    %216 = vmatprep.subr.mxu0 0.0
    %217 = vmatpush2.msra.mxu0 0.0
    %218 = vmatprep.subr.mxu0 0.0
    %219 = vmatpush2.msra.mxu0 0.0
    %220 = vmatprep.subr.mxu0 0.0
    %221 = vmatpush2.msra.mxu0 0.0
    %222 = vmatprep.subr.mxu0 0.0
    %223 = vmatpush2.msra.mxu0 0.0
    %224 = vmatprep.mubr.f32.mxu0 0.0
    %225 = vmatmul.mubr.f32.gmra.mxu0 %v154
    %v226 = vpop.f32.mrf.mxu0
    %v227 = vadd.f32 %v151, %v226
    %v228 = vpop.f32.mrf.mxu0
    %229 = vdwg.mxu0
    %v231 = vsel %vm152, %v53, 0
    %v234 = vsel %vm152, %v54, 0
    %v237 = vsel %vm156, %v37, 0
    %239 = vmatprep.subr.mxu0 0.0
    %240 = vmatpush1.msra.mxu0 0.0
    %241 = vmatprep.subr.mxu0 0.0
    %242 = vmatpush1.msra.mxu0 0.0
    %243 = vmatprep.subr.mxu0 0.0
    %244 = vmatpush1.msra.mxu0 0.0
    %245 = vmatprep.subr.mxu0 0.0
    %246 = vmatpush1.msra.mxu0 0.0
    %247 = vmatprep.subr.mxu0 0.0
    %248 = vmatpush1.msra.mxu0 0.0
    %249 = vmatprep.subr.mxu0 0.0
    %250 = vmatpush1.msra.mxu0 0.0
    %251 = vmatprep.subr.mxu0 0.0
    %252 = vmatpush1.msra.mxu0 0.0
    %253 = vmatprep.subr.mxu0 0.0
    %254 = vmatpush1.msra.mxu0 0.0
    %255 = vmatprep.subr.mxu0 0.0
    %256 = vmatpush1.msra.mxu0 0.0
    %257 = vmatprep.subr.mxu0 0.0
    %258 = vmatpush1.msra.mxu0 0.0
    %259 = vmatprep.subr.mxu0 0.0
    %260 = vmatpush1.msra.mxu0 0.0
    %261 = vmatprep.subr.mxu0 0.0
    %262 = vmatpush1.msra.mxu0 0.0
    %263 = vmatprep.subr.mxu0 0.0
    %264 = vmatpush1.msra.mxu0 0.0
    %265 = vmatprep.subr.mxu0 0.0
    %266 = vmatpush1.msra.mxu0 0.0
    %267 = vmatprep.subr.mxu0 0.0
    %268 = vmatpush1.msra.mxu0 0.0
    %269 = vmatprep.subr.mxu0 0.0
    %270 = vmatpush1.msra.mxu0 %v237
    %271 = vmatprep.subr.mxu0 0.0
    %272 = vmatpush2.msra.mxu0 0.0
    %273 = vmatprep.subr.mxu0 0.0
    %274 = vmatpush2.msra.mxu0 0.0
    %275 = vmatprep.subr.mxu0 0.0
    %276 = vmatpush2.msra.mxu0 0.0
    %277 = vmatprep.subr.mxu0 0.0
    %278 = vmatpush2.msra.mxu0 0.0
    %279 = vmatprep.subr.mxu0 0.0
    %280 = vmatpush2.msra.mxu0 0.0
    %281 = vmatprep.subr.mxu0 0.0
    %282 = vmatpush2.msra.mxu0 0.0
    %283 = vmatprep.subr.mxu0 0.0
    %284 = vmatpush2.msra.mxu0 0.0
    %285 = vmatprep.subr.mxu0 0.0
    %286 = vmatpush2.msra.mxu0 0.0
    %287 = vmatprep.subr.mxu0 0.0
    %288 = vmatpush2.msra.mxu0 0.0
    %289 = vmatprep.subr.mxu0 0.0
    %290 = vmatpush2.msra.mxu0 0.0
    %291 = vmatprep.subr.mxu0 0.0
    %292 = vmatpush2.msra.mxu0 0.0
    %293 = vmatprep.subr.mxu0 0.0
    %294 = vmatpush2.msra.mxu0 0.0
    %295 = vmatprep.subr.mxu0 0.0
    %296 = vmatpush2.msra.mxu0 0.0
    %297 = vmatprep.subr.mxu0 0.0
    %298 = vmatpush2.msra.mxu0 0.0
    %299 = vmatprep.subr.mxu0 0.0
    %300 = vmatpush2.msra.mxu0 0.0
    %301 = vmatprep.subr.mxu0 0.0
    %302 = vmatpush2.msra.mxu0 0.0
    %303 = vmatprep.mubr.f32.mxu0 0.0
    %304 = vmatmul.mubr.f32.gmra.mxu0 %v231
    %v305 = vpop.f32.mrf.mxu0
    %v306 = vadd.f32 0.0, %v305
    %v307 = vpop.f32.mrf.mxu0
    %308 = vmatprep.mubr.f32.mxu0 0.0
    %309 = vmatmul.mubr.f32.gmra.mxu0 %v234
    %v310 = vpop.f32.mrf.mxu0
    %v311 = vadd.f32 0.0, %v310
    %v312 = vpop.f32.mrf.mxu0
    %313 = vdwg.mxu0
    %v315 = vsel %vm152, %v306, 0
    %v318 = vsel %vm152, %v311, 0
    %320 = vmatprep.subr.mxu0 0.0
    %321 = vmatpush1.msra.mxu0 0.0
    %322 = vmatprep.subr.mxu0 0.0
    %323 = vmatpush1.msra.mxu0 0.0
    %324 = vmatprep.subr.mxu0 0.0
    %325 = vmatpush1.msra.mxu0 0.0
    %326 = vmatprep.subr.mxu0 0.0
    %327 = vmatpush1.msra.mxu0 0.0
    %328 = vmatprep.subr.mxu0 0.0
    %329 = vmatpush1.msra.mxu0 0.0
    %330 = vmatprep.subr.mxu0 0.0
    %331 = vmatpush1.msra.mxu0 0.0
    %332 = vmatprep.subr.mxu0 0.0
    %333 = vmatpush1.msra.mxu0 0.0
    %334 = vmatprep.subr.mxu0 0.0
    %335 = vmatpush1.msra.mxu0 0.0
    %336 = vmatprep.subr.mxu0 0.0
    %337 = vmatpush1.msra.mxu0 0.0
    %338 = vmatprep.subr.mxu0 0.0
    %339 = vmatpush1.msra.mxu0 0.0
    %340 = vmatprep.subr.mxu0 0.0
    %341 = vmatpush1.msra.mxu0 0.0
    %342 = vmatprep.subr.mxu0 0.0
    %343 = vmatpush1.msra.mxu0 0.0
    %344 = vmatprep.subr.mxu0 0.0
    %345 = vmatpush1.msra.mxu0 0.0
    %346 = vmatprep.subr.mxu0 0.0
    %347 = vmatpush1.msra.mxu0 0.0
    %348 = vmatprep.subr.mxu0 0.0
    %349 = vmatpush1.msra.mxu0 0.0
    %350 = vmatprep.subr.mxu0 0.0
    %351 = vmatpush1.msra.mxu0 %v158
    %352 = vmatprep.subr.mxu0 0.0
    %353 = vmatpush2.msra.mxu0 0.0
    %354 = vmatprep.subr.mxu0 0.0
    %355 = vmatpush2.msra.mxu0 0.0
    %356 = vmatprep.subr.mxu0 0.0
    %357 = vmatpush2.msra.mxu0 0.0
    %358 = vmatprep.subr.mxu0 0.0
    %359 = vmatpush2.msra.mxu0 0.0
    %360 = vmatprep.subr.mxu0 0.0
    %361 = vmatpush2.msra.mxu0 0.0
    %362 = vmatprep.subr.mxu0 0.0
    %363 = vmatpush2.msra.mxu0 0.0
    %364 = vmatprep.subr.mxu0 0.0
    %365 = vmatpush2.msra.mxu0 0.0
    %366 = vmatprep.subr.mxu0 0.0
    %367 = vmatpush2.msra.mxu0 0.0
    %368 = vmatprep.subr.mxu0 0.0
    %369 = vmatpush2.msra.mxu0 0.0
    %370 = vmatprep.subr.mxu0 0.0
    %371 = vmatpush2.msra.mxu0 0.0
    %372 = vmatprep.subr.mxu0 0.0
    %373 = vmatpush2.msra.mxu0 0.0
    %374 = vmatprep.subr.mxu0 0.0
    %375 = vmatpush2.msra.mxu0 0.0
    %376 = vmatprep.subr.mxu0 0.0
    %377 = vmatpush2.msra.mxu0 0.0
    %378 = vmatprep.subr.mxu0 0.0
    %379 = vmatpush2.msra.mxu0 0.0
    %380 = vmatprep.subr.mxu0 0.0
    %381 = vmatpush2.msra.mxu0 0.0
    %382 = vmatprep.subr.mxu0 0.0
    %383 = vmatpush2.msra.mxu0 0.0
    %384 = vmatprep.mubr.f32.mxu0 0.0
    %385 = vmatmul.mubr.f32.gmra.mxu0 %v315
    %v386 = vpop.f32.mrf.mxu0
    %v387 = vadd.f32 0.0, %v386
    %v388 = vpop.f32.mrf.mxu0
    %389 = vmatprep.mubr.f32.mxu0 0.0
    %390 = vmatmul.mubr.f32.gmra.mxu0 %v318
    %v391 = vpop.f32.mrf.mxu0
    %v392 = vadd.f32 0.0, %v391
    %v393 = vpop.f32.mrf.mxu0
    %394 = vdwg.mxu0
    %v395 = vpack.c.bf16 %v28, %v27
    %v396 = vpack.c.bf16 %v30, %v29
    %v397 = vadd.f32 %v227, %v387
    %v398 = vpack.c.bf16 %v50, %v50
    %v400 = vsel %vm74, %v398, 0
    %402 = vmatprep.subr.bf16.mxu0 0
    %403 = vmatpush1.bf16.msra.mxu0 0
    %404 = vmatprep.subr.bf16.mxu0 0
    %405 = vmatpush1.bf16.msra.mxu0 0
    %406 = vmatprep.subr.bf16.mxu0 0
    %407 = vmatpush1.bf16.msra.mxu0 0
    %408 = vmatprep.subr.bf16.mxu0 0
    %409 = vmatpush1.bf16.msra.mxu0 0
    %410 = vmatprep.subr.bf16.mxu0 0
    %411 = vmatpush1.bf16.msra.mxu0 0
    %412 = vmatprep.subr.bf16.mxu0 0
    %413 = vmatpush1.bf16.msra.mxu0 0
    %414 = vmatprep.subr.bf16.mxu0 0
    %415 = vmatpush1.bf16.msra.mxu0 %v396
    %416 = vmatprep.subr.bf16.mxu0 0
    %417 = vmatpush1.bf16.msra.mxu0 %v395
    %418 = vmatprep.subr.bf16.mxu0 0
    %419 = vmatpush2.bf16.msra.mxu0 0
    %420 = vmatprep.subr.bf16.mxu0 0
    %421 = vmatpush2.bf16.msra.mxu0 0
    %422 = vmatprep.subr.bf16.mxu0 0
    %423 = vmatpush2.bf16.msra.mxu0 0
    %424 = vmatprep.subr.bf16.mxu0 0
    %425 = vmatpush2.bf16.msra.mxu0 0
    %426 = vmatprep.subr.bf16.mxu0 0
    %427 = vmatpush2.bf16.msra.mxu0 0
    %428 = vmatprep.subr.bf16.mxu0 0
    %429 = vmatpush2.bf16.msra.mxu0 0
    %430 = vmatprep.subr.bf16.mxu0 0
    %431 = vmatpush2.bf16.msra.mxu0 0
    %432 = vmatprep.subr.bf16.mxu0 0
    %433 = vmatpush2.bf16.msra.mxu0 0
    %434 = vmatprep.mubr.bf16.mxu0 0
    %435 = vmatmul.mubr.bf16.gmra.mxu0 %v400
    %v436 = vpop.f32.mrf.mxu0
    %v437 = vadd.f32 0.0, %v436
    %v438 = vpop.f32.mrf.mxu0
    %v439 = vpop.f32.mrf.mxu0
    %v440 = vpop.f32.mrf.mxu0
    %441 = vdwg.mxu0
    %v442 = vadd.f32 %v397, %v437
    %v443 = vxor.u32 %v442, 2147483648
    %v444 = vmul.f32 %v443, 1.442695
    %v445 = vpow.pop %v444
    %v446 = vadd.f32 %v445, 1.0
    %v447 = vrcp.pop %v446
    %v448 = vmul.f32 1.0, %v447
    %v449 = vtanh.pop %v442
    %451 = vrot.lane.b32.xlu0 %v51, 32
    %v452 = vpop.permute.xlu0 %451
    %v454 = vmul.f32 %v448, %v452
    %456 = vrot.lane.b32.xlu0 %v449, 64
    %v457 = vpop.permute.xlu0 %456
    %v459 = vmul.f32 %v448, %v457
    %461 = vrot.lane.b32.xlu0 %v459, 32
    %v462 = vpop.permute.xlu0 %461
    %v464 = vadd.f32 %v454, %v462
    %v465 = vtanh.pop %v464
    %467 = vrot.lane.b32.xlu0 %v465, 64
    %v468 = vpop.permute.xlu0 %467
    %v470 = vmul.f32 %v448, %v468
    %v472 = vrot.slane %v387, 2
    %v474 = vadd.f32 %v227, %v472
    %v475 = vpack.c.bf16 %v470, %v470
    %477 = vrot.lane.b32.xlu0 %v475, 32
    %v478 = vpop.permute.xlu0 %477
    %v480 = vsel %vm74, %v478, 0
    %482 = vmatprep.subr.bf16.mxu0 0
    %483 = vmatpush1.bf16.msra.mxu0 0
    %484 = vmatprep.subr.bf16.mxu0 0
    %485 = vmatpush1.bf16.msra.mxu0 0
    %486 = vmatprep.subr.bf16.mxu0 0
    %487 = vmatpush1.bf16.msra.mxu0 0
    %488 = vmatprep.subr.bf16.mxu0 0
    %489 = vmatpush1.bf16.msra.mxu0 0
    %490 = vmatprep.subr.bf16.mxu0 0
    %491 = vmatpush1.bf16.msra.mxu0 0
    %492 = vmatprep.subr.bf16.mxu0 0
    %493 = vmatpush1.bf16.msra.mxu0 0
    %494 = vmatprep.subr.bf16.mxu0 0
    %495 = vmatpush1.bf16.msra.mxu0 %v396
    %496 = vmatprep.subr.bf16.mxu0 0
    %497 = vmatpush1.bf16.msra.mxu0 %v395
    %498 = vmatprep.subr.bf16.mxu0 0
    %499 = vmatpush2.bf16.msra.mxu0 0
    %500 = vmatprep.subr.bf16.mxu0 0
    %501 = vmatpush2.bf16.msra.mxu0 0
    %502 = vmatprep.subr.bf16.mxu0 0
    %503 = vmatpush2.bf16.msra.mxu0 0
    %504 = vmatprep.subr.bf16.mxu0 0
    %505 = vmatpush2.bf16.msra.mxu0 0
    %506 = vmatprep.subr.bf16.mxu0 0
    %507 = vmatpush2.bf16.msra.mxu0 0
    %508 = vmatprep.subr.bf16.mxu0 0
    %509 = vmatpush2.bf16.msra.mxu0 0
    %510 = vmatprep.subr.bf16.mxu0 0
    %511 = vmatpush2.bf16.msra.mxu0 0
    %512 = vmatprep.subr.bf16.mxu0 0
    %513 = vmatpush2.bf16.msra.mxu0 0
    %514 = vmatprep.mubr.bf16.mxu0 0
    %515 = vmatmul.mubr.bf16.gmra.mxu0 %v480
    %v516 = vpop.f32.mrf.mxu0
    %v517 = vadd.f32 0.0, %v516
    %v518 = vpop.f32.mrf.mxu0
    %v519 = vpop.f32.mrf.mxu0
    %v520 = vpop.f32.mrf.mxu0
    %521 = vdwg.mxu0
    %v522 = vadd.f32 %v474, %v517
    %v523 = vxor.u32 %v522, 2147483648
    %v524 = vmul.f32 %v523, 1.442695
    %v525 = vpow.pop %v524
    %v526 = vadd.f32 %v525, 1.0
    %v527 = vrcp.pop %v526
    %v528 = vmul.f32 1.0, %v527
    %v529 = vtanh.pop %v522
    %v530 = vmul.f32 %v528, %v464
    %532 = vrot.lane.b32.xlu0 %v529, 64
    %v533 = vpop.permute.xlu0 %532
    %v535 = vmul.f32 %v528, %v533
    %537 = vrot.lane.b32.xlu0 %v535, 32
    %v538 = vpop.permute.xlu0 %537
    %v540 = vadd.f32 %v530, %v538
    %v541 = vtanh.pop %v540
    %543 = vrot.lane.b32.xlu0 %v541, 64
    %v544 = vpop.permute.xlu0 %543
    %v546 = vmul.f32 %v528, %v544
    %v547 = vrot.slane %v387, 4
    %v549 = vadd.f32 %v227, %v547
    %v550 = vpack.c.bf16 %v546, %v546
    %552 = vrot.lane.b32.xlu0 %v550, 32
    %v553 = vpop.permute.xlu0 %552
    %v555 = vsel %vm74, %v553, 0
    %557 = vmatprep.subr.bf16.mxu0 0
    %558 = vmatpush1.bf16.msra.mxu0 0
    %559 = vmatprep.subr.bf16.mxu0 0
    %560 = vmatpush1.bf16.msra.mxu0 0
    %561 = vmatprep.subr.bf16.mxu0 0
    %562 = vmatpush1.bf16.msra.mxu0 0
    %563 = vmatprep.subr.bf16.mxu0 0
    %564 = vmatpush1.bf16.msra.mxu0 0
    %565 = vmatprep.subr.bf16.mxu0 0
    %566 = vmatpush1.bf16.msra.mxu0 0
    %567 = vmatprep.subr.bf16.mxu0 0
    %568 = vmatpush1.bf16.msra.mxu0 0
    %569 = vmatprep.subr.bf16.mxu0 0
    %570 = vmatpush1.bf16.msra.mxu0 %v396
    %571 = vmatprep.subr.bf16.mxu0 0
    %572 = vmatpush1.bf16.msra.mxu0 %v395
    %573 = vmatprep.subr.bf16.mxu0 0
    %574 = vmatpush2.bf16.msra.mxu0 0
    %575 = vmatprep.subr.bf16.mxu0 0
    %576 = vmatpush2.bf16.msra.mxu0 0
    %577 = vmatprep.subr.bf16.mxu0 0
    %578 = vmatpush2.bf16.msra.mxu0 0
    %579 = vmatprep.subr.bf16.mxu0 0
    %580 = vmatpush2.bf16.msra.mxu0 0
    %581 = vmatprep.subr.bf16.mxu0 0
    %582 = vmatpush2.bf16.msra.mxu0 0
    %583 = vmatprep.subr.bf16.mxu0 0
    %584 = vmatpush2.bf16.msra.mxu0 0
    %585 = vmatprep.subr.bf16.mxu0 0
    %586 = vmatpush2.bf16.msra.mxu0 0
    %587 = vmatprep.subr.bf16.mxu0 0
    %588 = vmatpush2.bf16.msra.mxu0 0
    %589 = vmatprep.mubr.bf16.mxu0 0
    %590 = vmatmul.mubr.bf16.gmra.mxu0 %v555
    %v591 = vpop.f32.mrf.mxu0
    %v592 = vadd.f32 0.0, %v591
    %v593 = vpop.f32.mrf.mxu0
    %v594 = vpop.f32.mrf.mxu0
    %v595 = vpop.f32.mrf.mxu0
    %596 = vdwg.mxu0
    %v597 = vadd.f32 %v549, %v592
    %v598 = vxor.u32 %v597, 2147483648
    %v599 = vmul.f32 %v598, 1.442695
    %v600 = vpow.pop %v599
    %v601 = vadd.f32 %v600, 1.0
    %v602 = vrcp.pop %v601
    %v603 = vmul.f32 1.0, %v602
    %v604 = vtanh.pop %v597
    %v605 = vmul.f32 %v603, %v540
    %607 = vrot.lane.b32.xlu0 %v604, 64
    %v608 = vpop.permute.xlu0 %607
    %v610 = vmul.f32 %v603, %v608
    %612 = vrot.lane.b32.xlu0 %v610, 32
    %v613 = vpop.permute.xlu0 %612
    %v615 = vadd.f32 %v605, %v613
    %v616 = vtanh.pop %v615
    %618 = vrot.lane.b32.xlu0 %v616, 64
    %v619 = vpop.permute.xlu0 %618
    %v621 = vmul.f32 %v603, %v619
    %v622 = vrot.slane %v387, 6
    %v624 = vadd.f32 %v227, %v622
    %v625 = vpack.c.bf16 %v621, %v621
    %627 = vrot.lane.b32.xlu0 %v625, 32
    %v628 = vpop.permute.xlu0 %627
    %v630 = vsel %vm74, %v628, 0
    %632 = vmatprep.subr.bf16.mxu0 0
    %633 = vmatpush1.bf16.msra.mxu0 0
    %634 = vmatprep.subr.bf16.mxu0 0
    %635 = vmatpush1.bf16.msra.mxu0 0
    %636 = vmatprep.subr.bf16.mxu0 0
    %637 = vmatpush1.bf16.msra.mxu0 0
    %638 = vmatprep.subr.bf16.mxu0 0
    %639 = vmatpush1.bf16.msra.mxu0 0
    %640 = vmatprep.subr.bf16.mxu0 0
    %641 = vmatpush1.bf16.msra.mxu0 0
    %642 = vmatprep.subr.bf16.mxu0 0
    %643 = vmatpush1.bf16.msra.mxu0 0
    %644 = vmatprep.subr.bf16.mxu0 0
    %645 = vmatpush1.bf16.msra.mxu0 %v396
    %646 = vmatprep.subr.bf16.mxu0 0
    %647 = vmatpush1.bf16.msra.mxu0 %v395
    %648 = vmatprep.subr.bf16.mxu0 0
    %649 = vmatpush2.bf16.msra.mxu0 0
    %650 = vmatprep.subr.bf16.mxu0 0
    %651 = vmatpush2.bf16.msra.mxu0 0
    %652 = vmatprep.subr.bf16.mxu0 0
    %653 = vmatpush2.bf16.msra.mxu0 0
    %654 = vmatprep.subr.bf16.mxu0 0
    %655 = vmatpush2.bf16.msra.mxu0 0
    %656 = vmatprep.subr.bf16.mxu0 0
    %657 = vmatpush2.bf16.msra.mxu0 0
    %658 = vmatprep.subr.bf16.mxu0 0
    %659 = vmatpush2.bf16.msra.mxu0 0
    %660 = vmatprep.subr.bf16.mxu0 0
    %661 = vmatpush2.bf16.msra.mxu0 0
    %662 = vmatprep.subr.bf16.mxu0 0
    %663 = vmatpush2.bf16.msra.mxu0 0
    %664 = vmatprep.mubr.bf16.mxu0 0
    %665 = vmatmul.mubr.bf16.gmra.mxu0 %v630
    %v666 = vpop.f32.mrf.mxu0
    %v667 = vadd.f32 0.0, %v666
    %v668 = vpop.f32.mrf.mxu0
    %v669 = vpop.f32.mrf.mxu0
    %v670 = vpop.f32.mrf.mxu0
    %671 = vdwg.mxu0
    %v672 = vadd.f32 %v624, %v667
    %v673 = vxor.u32 %v672, 2147483648
    %v674 = vmul.f32 %v673, 1.442695
    %v675 = vpow.pop %v674
    %v676 = vadd.f32 %v675, 1.0
    %v677 = vrcp.pop %v676
    %v678 = vmul.f32 1.0, %v677
    %v679 = vtanh.pop %v672
    %v680 = vmul.f32 %v678, %v615
    %682 = vrot.lane.b32.xlu0 %v679, 64
    %v683 = vpop.permute.xlu0 %682
    %v685 = vmul.f32 %v678, %v683
    %687 = vrot.lane.b32.xlu0 %v685, 32
    %v688 = vpop.permute.xlu0 %687
    %v690 = vadd.f32 %v680, %v688
    %v691 = vtanh.pop %v690
    %693 = vrot.lane.b32.xlu0 %v691, 64
    %v694 = vpop.permute.xlu0 %693
    %v696 = vmul.f32 %v678, %v694
    %v697 = vadd.f32 %v227, %v392
    %v698 = vpack.c.bf16 %v696, %v696
    %700 = vrot.lane.b32.xlu0 %v698, 32
    %v701 = vpop.permute.xlu0 %700
    %v703 = vsel %vm74, %v701, 0
    %705 = vmatprep.subr.bf16.mxu0 0
    %706 = vmatpush1.bf16.msra.mxu0 0
    %707 = vmatprep.subr.bf16.mxu0 0
    %708 = vmatpush1.bf16.msra.mxu0 0
    %709 = vmatprep.subr.bf16.mxu0 0
    %710 = vmatpush1.bf16.msra.mxu0 0
    %711 = vmatprep.subr.bf16.mxu0 0
    %712 = vmatpush1.bf16.msra.mxu0 0
    %713 = vmatprep.subr.bf16.mxu0 0
    %714 = vmatpush1.bf16.msra.mxu0 0
    %715 = vmatprep.subr.bf16.mxu0 0
    %716 = vmatpush1.bf16.msra.mxu0 0
    %717 = vmatprep.subr.bf16.mxu0 0
    %718 = vmatpush1.bf16.msra.mxu0 %v396
    %719 = vmatprep.subr.bf16.mxu0 0
    %720 = vmatpush1.bf16.msra.mxu0 %v395
    %721 = vmatprep.subr.bf16.mxu0 0
    %722 = vmatpush2.bf16.msra.mxu0 0
    %723 = vmatprep.subr.bf16.mxu0 0
    %724 = vmatpush2.bf16.msra.mxu0 0
    %725 = vmatprep.subr.bf16.mxu0 0
    %726 = vmatpush2.bf16.msra.mxu0 0
    %727 = vmatprep.subr.bf16.mxu0 0
    %728 = vmatpush2.bf16.msra.mxu0 0
    %729 = vmatprep.subr.bf16.mxu0 0
    %730 = vmatpush2.bf16.msra.mxu0 0
    %731 = vmatprep.subr.bf16.mxu0 0
    %732 = vmatpush2.bf16.msra.mxu0 0
    %733 = vmatprep.subr.bf16.mxu0 0
    %734 = vmatpush2.bf16.msra.mxu0 0
    %735 = vmatprep.subr.bf16.mxu0 0
    %736 = vmatpush2.bf16.msra.mxu0 0
    %737 = vmatprep.mubr.bf16.mxu0 0
    %738 = vmatmul.mubr.bf16.gmra.mxu0 %v703
    %v739 = vpop.f32.mrf.mxu0
    %v740 = vadd.f32 0.0, %v739
    %v741 = vpop.f32.mrf.mxu0
    %v742 = vpop.f32.mrf.mxu0
    %v743 = vpop.f32.mrf.mxu0
    %744 = vdwg.mxu0
    %v745 = vadd.f32 %v697, %v740
    %v746 = vxor.u32 %v745, 2147483648
    %v747 = vmul.f32 %v746, 1.442695
    %v748 = vpow.pop %v747
    %v749 = vadd.f32 %v748, 1.0
    %v750 = vrcp.pop %v749
    %v751 = vmul.f32 1.0, %v750
    %v752 = vtanh.pop %v745
    %v753 = vmul.f32 %v751, %v690
    %755 = vrot.lane.b32.xlu0 %v752, 64
    %v756 = vpop.permute.xlu0 %755
    %v758 = vmul.f32 %v751, %v756
    %760 = vrot.lane.b32.xlu0 %v758, 32
    %v761 = vpop.permute.xlu0 %760
    %v763 = vadd.f32 %v753, %v761
    %v764 = vtanh.pop %v763
    %766 = vrot.lane.b32.xlu0 %v764, 64
    %v767 = vpop.permute.xlu0 %766
    %v769 = vmul.f32 %v751, %v767
    %v771 = vrot.slane %v392, 2
    %v773 = vadd.f32 %v227, %v771
    %v774 = vpack.c.bf16 %v769, %v769
    %776 = vrot.lane.b32.xlu0 %v774, 32
    %v777 = vpop.permute.xlu0 %776
    %v779 = vsel %vm74, %v777, 0
    %781 = vmatprep.subr.bf16.mxu0 0
    %782 = vmatpush1.bf16.msra.mxu0 0
    %783 = vmatprep.subr.bf16.mxu0 0
    %784 = vmatpush1.bf16.msra.mxu0 0
    %785 = vmatprep.subr.bf16.mxu0 0
    %786 = vmatpush1.bf16.msra.mxu0 0
    %787 = vmatprep.subr.bf16.mxu0 0
    %788 = vmatpush1.bf16.msra.mxu0 0
    %789 = vmatprep.subr.bf16.mxu0 0
    %790 = vmatpush1.bf16.msra.mxu0 0
    %791 = vmatprep.subr.bf16.mxu0 0
    %792 = vmatpush1.bf16.msra.mxu0 0
    %793 = vmatprep.subr.bf16.mxu0 0
    %794 = vmatpush1.bf16.msra.mxu0 %v396
    %795 = vmatprep.subr.bf16.mxu0 0
    %796 = vmatpush1.bf16.msra.mxu0 %v395
    %797 = vmatprep.subr.bf16.mxu0 0
    %798 = vmatpush2.bf16.msra.mxu0 0
    %799 = vmatprep.subr.bf16.mxu0 0
    %800 = vmatpush2.bf16.msra.mxu0 0
    %801 = vmatprep.subr.bf16.mxu0 0
    %802 = vmatpush2.bf16.msra.mxu0 0
    %803 = vmatprep.subr.bf16.mxu0 0
    %804 = vmatpush2.bf16.msra.mxu0 0
    %805 = vmatprep.subr.bf16.mxu0 0
    %806 = vmatpush2.bf16.msra.mxu0 0
    %807 = vmatprep.subr.bf16.mxu0 0
    %808 = vmatpush2.bf16.msra.mxu0 0
    %809 = vmatprep.subr.bf16.mxu0 0
    %810 = vmatpush2.bf16.msra.mxu0 0
    %811 = vmatprep.subr.bf16.mxu0 0
    %812 = vmatpush2.bf16.msra.mxu0 0
    %813 = vmatprep.mubr.bf16.mxu0 0
    %814 = vmatmul.mubr.bf16.gmra.mxu0 %v779
    %v815 = vpop.f32.mrf.mxu0
    %v816 = vadd.f32 0.0, %v815
    %v817 = vpop.f32.mrf.mxu0
    %v818 = vpop.f32.mrf.mxu0
    %v819 = vpop.f32.mrf.mxu0
    %820 = vdwg.mxu0
    %v821 = vadd.f32 %v773, %v816
    %v822 = vxor.u32 %v821, 2147483648
    %v823 = vmul.f32 %v822, 1.442695
    %v824 = vpow.pop %v823
    %v825 = vadd.f32 %v824, 1.0
    %v826 = vrcp.pop %v825
    %v827 = vmul.f32 1.0, %v826
    %v828 = vtanh.pop %v821
    %v829 = vmul.f32 %v827, %v763
    %831 = vrot.lane.b32.xlu0 %v828, 64
    %v832 = vpop.permute.xlu0 %831
    %v834 = vmul.f32 %v827, %v832
    %836 = vrot.lane.b32.xlu0 %v834, 32
    %v837 = vpop.permute.xlu0 %836
    %v839 = vadd.f32 %v829, %v837
    %v840 = vtanh.pop %v839
    %842 = vrot.lane.b32.xlu0 %v840, 64
    %v843 = vpop.permute.xlu0 %842
    %v845 = vmul.f32 %v827, %v843
    %v846 = vrot.slane %v392, 4
    %v848 = vadd.f32 %v227, %v846
    %v849 = vpack.c.bf16 %v845, %v845
    %851 = vrot.lane.b32.xlu0 %v849, 32
    %v852 = vpop.permute.xlu0 %851
    %v854 = vsel %vm74, %v852, 0
    %856 = vmatprep.subr.bf16.mxu0 0
    %857 = vmatpush1.bf16.msra.mxu0 0
    %858 = vmatprep.subr.bf16.mxu0 0
    %859 = vmatpush1.bf16.msra.mxu0 0
    %860 = vmatprep.subr.bf16.mxu0 0
    %861 = vmatpush1.bf16.msra.mxu0 0
    %862 = vmatprep.subr.bf16.mxu0 0
    %863 = vmatpush1.bf16.msra.mxu0 0
    %864 = vmatprep.subr.bf16.mxu0 0
    %865 = vmatpush1.bf16.msra.mxu0 0
    %866 = vmatprep.subr.bf16.mxu0 0
    %867 = vmatpush1.bf16.msra.mxu0 0
    %868 = vmatprep.subr.bf16.mxu0 0
    %869 = vmatpush1.bf16.msra.mxu0 %v396
    %870 = vmatprep.subr.bf16.mxu0 0
    %871 = vmatpush1.bf16.msra.mxu0 %v395
    %872 = vmatprep.subr.bf16.mxu0 0
    %873 = vmatpush2.bf16.msra.mxu0 0
    %874 = vmatprep.subr.bf16.mxu0 0
    %875 = vmatpush2.bf16.msra.mxu0 0
    %876 = vmatprep.subr.bf16.mxu0 0
    %877 = vmatpush2.bf16.msra.mxu0 0
    %878 = vmatprep.subr.bf16.mxu0 0
    %879 = vmatpush2.bf16.msra.mxu0 0
    %880 = vmatprep.subr.bf16.mxu0 0
    %881 = vmatpush2.bf16.msra.mxu0 0
    %882 = vmatprep.subr.bf16.mxu0 0
    %883 = vmatpush2.bf16.msra.mxu0 0
    %884 = vmatprep.subr.bf16.mxu0 0
    %885 = vmatpush2.bf16.msra.mxu0 0
    %886 = vmatprep.subr.bf16.mxu0 0
    %887 = vmatpush2.bf16.msra.mxu0 0
    %888 = vmatprep.mubr.bf16.mxu0 0
    %889 = vmatmul.mubr.bf16.gmra.mxu0 %v854
    %v890 = vpop.f32.mrf.mxu0
    %v891 = vadd.f32 0.0, %v890
    %v892 = vpop.f32.mrf.mxu0
    %v893 = vpop.f32.mrf.mxu0
    %v894 = vpop.f32.mrf.mxu0
    %895 = vdwg.mxu0
    %v896 = vadd.f32 %v848, %v891
    %v897 = vxor.u32 %v896, 2147483648
    %v898 = vmul.f32 %v897, 1.442695
    %v899 = vpow.pop %v898
    %v900 = vadd.f32 %v899, 1.0
    %v901 = vrcp.pop %v900
    %v902 = vmul.f32 1.0, %v901
    %v903 = vtanh.pop %v896
    %v904 = vmul.f32 %v902, %v839
    %906 = vrot.lane.b32.xlu0 %v903, 64
    %v907 = vpop.permute.xlu0 %906
    %v909 = vmul.f32 %v902, %v907
    %911 = vrot.lane.b32.xlu0 %v909, 32
    %v912 = vpop.permute.xlu0 %911
    %v914 = vadd.f32 %v904, %v912
    %v915 = vtanh.pop %v914
    %917 = vrot.lane.b32.xlu0 %v915, 64
    %v918 = vpop.permute.xlu0 %917
    %v920 = vmul.f32 %v902, %v918
    %v921 = vrot.slane %v392, 6
    %v923 = vadd.f32 %v227, %v921
    %v924 = vpack.c.bf16 %v920, %v920
    %926 = vrot.lane.b32.xlu0 %v924, 32
    %v927 = vpop.permute.xlu0 %926
    %v929 = vsel %vm74, %v927, 0
    %931 = vmatprep.subr.bf16.mxu0 0
    %932 = vmatpush1.bf16.msra.mxu0 0
    %933 = vmatprep.subr.bf16.mxu0 0
    %934 = vmatpush1.bf16.msra.mxu0 0
    %935 = vmatprep.subr.bf16.mxu0 0
    %936 = vmatpush1.bf16.msra.mxu0 0
    %937 = vmatprep.subr.bf16.mxu0 0
    %938 = vmatpush1.bf16.msra.mxu0 0
    %939 = vmatprep.subr.bf16.mxu0 0
    %940 = vmatpush1.bf16.msra.mxu0 0
    %941 = vmatprep.subr.bf16.mxu0 0
    %942 = vmatpush1.bf16.msra.mxu0 0
    %943 = vmatprep.subr.bf16.mxu0 0
    %944 = vmatpush1.bf16.msra.mxu0 %v396
    %945 = vmatprep.subr.bf16.mxu0 0
    %946 = vmatpush1.bf16.msra.mxu0 %v395
    %947 = vmatprep.subr.bf16.mxu0 0
    %948 = vmatpush2.bf16.msra.mxu0 0
    %949 = vmatprep.subr.bf16.mxu0 0
    %950 = vmatpush2.bf16.msra.mxu0 0
    %951 = vmatprep.subr.bf16.mxu0 0
    %952 = vmatpush2.bf16.msra.mxu0 0
    %953 = vmatprep.subr.bf16.mxu0 0
    %954 = vmatpush2.bf16.msra.mxu0 0
    %955 = vmatprep.subr.bf16.mxu0 0
    %956 = vmatpush2.bf16.msra.mxu0 0
    %957 = vmatprep.subr.bf16.mxu0 0
    %958 = vmatpush2.bf16.msra.mxu0 0
    %959 = vmatprep.subr.bf16.mxu0 0
    %960 = vmatpush2.bf16.msra.mxu0 0
    %961 = vmatprep.subr.bf16.mxu0 0
    %962 = vmatpush2.bf16.msra.mxu0 0
    %963 = vmatprep.mubr.bf16.mxu0 0
    %964 = vmatmul.mubr.bf16.gmra.mxu0 %v929
    %v965 = vpop.f32.mrf.mxu0
    %v966 = vadd.f32 0.0, %v965
    %v967 = vpop.f32.mrf.mxu0
    %v968 = vpop.f32.mrf.mxu0
    %v969 = vpop.f32.mrf.mxu0
    %970 = vdwg.mxu0
    %v971 = vadd.f32 %v923, %v966
    %v972 = vxor.u32 %v971, 2147483648
    %v973 = vmul.f32 %v972, 1.442695
    %v974 = vpow.pop %v973
    %v975 = vadd.f32 %v974, 1.0
    %v976 = vrcp.pop %v975
    %v977 = vmul.f32 1.0, %v976
    %v978 = vtanh.pop %v971
    %v979 = vmul.f32 %v977, %v914
    %981 = vrot.lane.b32.xlu0 %v978, 64
    %v982 = vpop.permute.xlu0 %981
    %v984 = vmul.f32 %v977, %v982
    %986 = vrot.lane.b32.xlu0 %v984, 32
    %v987 = vpop.permute.xlu0 %986
    %v989 = vadd.f32 %v979, %v987
    %v990 = vtanh.pop %v989
    %992 = vrot.lane.b32.xlu0 %v990, 64
    %v993 = vpop.permute.xlu0 %992
    %v995 = vmul.f32 %v977, %v993
    %996 = vmatprep.subr.mxu0 0.0
    %997 = vmatpush1.msra.mxu0 0.0
    %998 = vmatprep.subr.mxu0 0.0
    %999 = vmatpush1.msra.mxu0 0.0
    %1000 = vmatprep.subr.mxu0 0.0
    %1001 = vmatpush1.msra.mxu0 0.0
    %1002 = vmatprep.subr.mxu0 0.0
    %1003 = vmatpush1.msra.mxu0 0.0
    %1004 = vmatprep.subr.mxu0 0.0
    %1005 = vmatpush1.msra.mxu0 0.0
    %1006 = vmatprep.subr.mxu0 0.0
    %1007 = vmatpush1.msra.mxu0 0.0
    %1008 = vmatprep.subr.mxu0 0.0
    %1009 = vmatpush1.msra.mxu0 0.0
    %1010 = vmatprep.subr.mxu0 0.0
    %1011 = vmatpush1.msra.mxu0 0.0
    %1012 = vmatprep.subr.mxu0 0.0
    %1013 = vmatpush1.msra.mxu0 0.0
    %1014 = vmatprep.subr.mxu0 0.0
    %1015 = vmatpush1.msra.mxu0 0.0
    %1016 = vmatprep.subr.mxu0 0.0
    %1017 = vmatpush1.msra.mxu0 0.0
    %1018 = vmatprep.subr.mxu0 0.0
    %1019 = vmatpush1.msra.mxu0 0.0
    %1020 = vmatprep.subr.mxu0 0.0
    %1021 = vmatpush1.msra.mxu0 %v46
    %1022 = vmatprep.subr.mxu0 0.0
    %1023 = vmatpush1.msra.mxu0 %v45
    %1024 = vmatprep.subr.mxu0 0.0
    %1025 = vmatpush1.msra.mxu0 %v44
    %1026 = vmatprep.subr.mxu0 0.0
    %1027 = vmatpush1.msra.mxu0 %v43
    %1028 = vmatprep.subr.mxu0 0.0
    %1029 = vmatpush2.msra.mxu0 0.0
    %1030 = vmatprep.subr.mxu0 0.0
    %1031 = vmatpush2.msra.mxu0 0.0
    %1032 = vmatprep.subr.mxu0 0.0
    %1033 = vmatpush2.msra.mxu0 0.0
    %1034 = vmatprep.subr.mxu0 0.0
    %1035 = vmatpush2.msra.mxu0 0.0
    %1036 = vmatprep.subr.mxu0 0.0
    %1037 = vmatpush2.msra.mxu0 0.0
    %1038 = vmatprep.subr.mxu0 0.0
    %1039 = vmatpush2.msra.mxu0 0.0
    %1040 = vmatprep.subr.mxu0 0.0
    %1041 = vmatpush2.msra.mxu0 0.0
    %1042 = vmatprep.subr.mxu0 0.0
    %1043 = vmatpush2.msra.mxu0 0.0
    %1044 = vmatprep.subr.mxu0 0.0
    %1045 = vmatpush2.msra.mxu0 0.0
    %1046 = vmatprep.subr.mxu0 0.0
    %1047 = vmatpush2.msra.mxu0 0.0
    %1048 = vmatprep.subr.mxu0 0.0
    %1049 = vmatpush2.msra.mxu0 0.0
    %1050 = vmatprep.subr.mxu0 0.0
    %1051 = vmatpush2.msra.mxu0 0.0
    %1052 = vmatprep.subr.mxu0 0.0
    %1053 = vmatpush2.msra.mxu0 0.0
    %1054 = vmatprep.subr.mxu0 0.0
    %1055 = vmatpush2.msra.mxu0 0.0
    %1056 = vmatprep.subr.mxu0 0.0
    %1057 = vmatpush2.msra.mxu0 0.0
    %1058 = vmatprep.subr.mxu0 0.0
    %1059 = vmatpush2.msra.mxu0 0.0
    %1060 = vmatprep.mubr.f32.mxu0 0.0
    %1061 = vmatmul.mubr.f32.gmra.mxu0 %v76
    %v1062 = vpop.f32.mrf.mxu0
    %v1063 = vadd.f32 0.0, %v1062
    %v1064 = vpop.f32.mrf.mxu0
    %1065 = vdwg.mxu0
    %1067 = vrot.lane.b32.xlu0 %v995, 32
    %v1068 = vpop.permute.xlu0 %1067
    %v1069 = vsel %vm74, %v1068, 0
    %1071 = vmatprep.subr.mxu0 0.0
    %1072 = vmatpush1.msra.mxu0 0.0
    %1073 = vmatprep.subr.mxu0 0.0
    %1074 = vmatpush1.msra.mxu0 0.0
    %1075 = vmatprep.subr.mxu0 0.0
    %1076 = vmatpush1.msra.mxu0 0.0
    %1077 = vmatprep.subr.mxu0 0.0
    %1078 = vmatpush1.msra.mxu0 0.0
    %1079 = vmatprep.subr.mxu0 0.0
    %1080 = vmatpush1.msra.mxu0 0.0
    %1081 = vmatprep.subr.mxu0 0.0
    %1082 = vmatpush1.msra.mxu0 0.0
    %1083 = vmatprep.subr.mxu0 0.0
    %1084 = vmatpush1.msra.mxu0 0.0
    %1085 = vmatprep.subr.mxu0 0.0
    %1086 = vmatpush1.msra.mxu0 0.0
    %1087 = vmatprep.subr.mxu0 0.0
    %1088 = vmatpush1.msra.mxu0 0.0
    %1089 = vmatprep.subr.mxu0 0.0
    %1090 = vmatpush1.msra.mxu0 0.0
    %1091 = vmatprep.subr.mxu0 0.0
    %1092 = vmatpush1.msra.mxu0 0.0
    %1093 = vmatprep.subr.mxu0 0.0
    %1094 = vmatpush1.msra.mxu0 0.0
    %1095 = vmatprep.subr.mxu0 0.0
    %1096 = vmatpush1.msra.mxu0 %v42
    %1097 = vmatprep.subr.mxu0 0.0
    %1098 = vmatpush1.msra.mxu0 %v41
    %1099 = vmatprep.subr.mxu0 0.0
    %1100 = vmatpush1.msra.mxu0 %v40
    %1101 = vmatprep.subr.mxu0 0.0
    %1102 = vmatpush1.msra.mxu0 %v39
    %1103 = vmatprep.subr.mxu0 0.0
    %1104 = vmatpush2.msra.mxu0 0.0
    %1105 = vmatprep.subr.mxu0 0.0
    %1106 = vmatpush2.msra.mxu0 0.0
    %1107 = vmatprep.subr.mxu0 0.0
    %1108 = vmatpush2.msra.mxu0 0.0
    %1109 = vmatprep.subr.mxu0 0.0
    %1110 = vmatpush2.msra.mxu0 0.0
    %1111 = vmatprep.subr.mxu0 0.0
    %1112 = vmatpush2.msra.mxu0 0.0
    %1113 = vmatprep.subr.mxu0 0.0
    %1114 = vmatpush2.msra.mxu0 0.0
    %1115 = vmatprep.subr.mxu0 0.0
    %1116 = vmatpush2.msra.mxu0 0.0
    %1117 = vmatprep.subr.mxu0 0.0
    %1118 = vmatpush2.msra.mxu0 0.0
    %1119 = vmatprep.subr.mxu0 0.0
    %1120 = vmatpush2.msra.mxu0 0.0
    %1121 = vmatprep.subr.mxu0 0.0
    %1122 = vmatpush2.msra.mxu0 0.0
    %1123 = vmatprep.subr.mxu0 0.0
    %1124 = vmatpush2.msra.mxu0 0.0
    %1125 = vmatprep.subr.mxu0 0.0
    %1126 = vmatpush2.msra.mxu0 0.0
    %1127 = vmatprep.subr.mxu0 0.0
    %1128 = vmatpush2.msra.mxu0 0.0
    %1129 = vmatprep.subr.mxu0 0.0
    %1130 = vmatpush2.msra.mxu0 0.0
    %1131 = vmatprep.subr.mxu0 0.0
    %1132 = vmatpush2.msra.mxu0 0.0
    %1133 = vmatprep.subr.mxu0 0.0
    %1134 = vmatpush2.msra.mxu0 0.0
    %1135 = vmatprep.mubr.f32.mxu0 0.0
    %1136 = vmatmul.mubr.f32.gmra.mxu0 %v1069
    %v1137 = vpop.f32.mrf.mxu0
    %v1138 = vadd.f32 %v1063, %v1137
    %v1139 = vpop.f32.mrf.mxu0
    %1140 = vdwg.mxu0
    %v1141 = vlaneseq
    %v1142 = vshrl.u32 %v1141, 7
    %v1143 = vsub.s32 0, %v1142
    %v1144 = vrot.slane %v47, %v1143
    %v1145 = vadd.f32 %v1138, %v1144
    %vm1146 = vcmask 25600
    %1147 = vst.msk [vmem:[#allocation5] sm:$0x3] %vm1146, %v1145
    // Predicated region
    $region14: #{run.1} parent=1 // pred_check
      _
    $region15: #{run.1} parent=1 // pred_check_branch
      %1149 = sbr.rel (0) target = $region17
    $region16: #{run.1} parent=1 // pred_region
      %s1151 = ssub.s32 32, 32
      %1152 = vsyncadd [#allocation4], %s1151
      %s1154 = sshll.u32 [#allocation5], 4
      %s1155 = int_to_ptr.vmem [resolvable:$true] %s1154
      %1157 = dma.vmem_to_hbm [thread:$0]  %s1155, 32, %s2, [#allocation4]
    $region17: #{run.1} parent=1 // pred_fallthru
      _
    // Predicated region
    $region18: #{run.1} parent=1 // pred_check
      _
    $region19: #{run.1} parent=1 // pred_check_branch
      %1159 = sbr.rel (0) target = $region21
    $region20: #{run.1} parent=1 // pred_region
      %1160 = dma.done [#allocation4], 32
    $region21: #{run.1} parent=1 // pred_fallthru
      _
    %1161 = vsyncpa [#allocation3], 1
    %1162 = vsyncpa [#allocation4], 1

</llo_original>
